<compile_context>
chip_gen: v7x
topology: tpu7x:2x2x1
jax: 0.10.0
libtpu: 0.0.40
codegen_flags: <defaults>
</compile_context>

<pallas_src>
import functools

import jax
import jax.numpy as jnp
from jax import lax
from jax.experimental import pallas as pl
from jax.experimental.pallas import tpu as pltpu


def _attention_kernel(x_ref, wqkv_ref, wproj_ref, bproj_ref, o_ref, *, num_heads):
    N = x_ref.shape[1]
    C = x_ref.shape[2]
    hd = C // num_heads

    # Current batch's (N, C) slab; cast to bf16 for the MXU (f32 accumulation).
    x = x_ref[0].astype(jnp.bfloat16)

    # Fused QKV projection: one MXU pass with 3C output lanes (qkv Linear has no
    # bias). `scale` is already folded into the q columns; per-head columns are
    # contiguous: [q_h | k_h | v_h] for head h at lanes [h*3hd, (h+1)*3hd).
    qkv = jnp.dot(x, wqkv_ref[...], preferred_element_type=jnp.float32)  # (N, 3C) f32

    acc = jnp.zeros((N, C), jnp.float32)
    # Static unroll over heads (B is the grid axis, so this is only H copies).
    # TODO(synk): batched-head einsum / fori_loop for large H.
    for h in range(num_heads):
        base = 3 * hd * h
        qh = qkv[:, base:base + hd]                 # (N, hd) f32, pre-scaled
        kh = qkv[:, base + hd:base + 2 * hd]        # (N, hd) f32
        vh = qkv[:, base + 2 * hd:base + 3 * hd]    # (N, hd) f32

        # Scores: contract the last axes (no explicit XLU transpose of k).
        s = lax.dot_general(qh.astype(jnp.bfloat16), kh.astype(jnp.bfloat16),
                            (((1,), (1,)), ((), ())),
                            preferred_element_type=jnp.float32)          # (N, N) f32

        # Softmax strictly in f32; normalization via EUP approximate reciprocal.
        s = s - jnp.max(s, axis=-1, keepdims=True)
        p = jnp.exp(s)
        p = p * pl.reciprocal(jnp.sum(p, axis=-1, keepdims=True), approx=True)
        # TODO(synk): attn_drop is train-mode dropout; identity (eval semantics).

        ctx_h = jnp.dot(p.astype(jnp.bfloat16), vh.astype(jnp.bfloat16),
                        preferred_element_type=jnp.float32)              # (N, hd)

        # Accumulate this head's partial projection instead of lane-concatenating
        # hd-wide context chunks.
        acc = acc + jnp.dot(ctx_h.astype(jnp.bfloat16),
                            wproj_ref[h * hd:(h + 1) * hd, :],
                            preferred_element_type=jnp.float32)          # (N, C)

    out = acc + bproj_ref[...]
    # TODO(synk): proj_drop is train-mode dropout; identity (eval semantics).
    o_ref[0] = out.astype(o_ref.dtype)


def attention_forward(x, params, *, num_heads):
    B, N, C = x.shape
    assert C % num_heads == 0
    hd = C // num_heads
    scale = hd ** -0.5

    w_qkv = params["w_qkv"]            # (3C, C)  torch Linear weight (out, in)
    w_proj = params["w_proj"]          # (C, C)
    b_proj = params["b_proj"]          # (C,)

    # ---- host-side weight plumbing (layout + scale folding + bf16 cast) ----
    wq, wk, wv = jnp.split(w_qkv, 3, axis=0)           # each (C, C)
    wq = wq * scale                                     # fold softmax scale into q
    per_head = lambda w: w.reshape(num_heads, hd, C)
    w_heads = jnp.concatenate([per_head(wq), per_head(wk), per_head(wv)],
                              axis=1)                   # (H, 3hd, C)
    wqkv_t = w_heads.reshape(3 * C, C).T.astype(jnp.bfloat16)   # (C, 3C), per-head [q|k|v] cols
    wproj_t = w_proj.T.astype(jnp.bfloat16)             # (C, C): rows = ctx channels
    bp = b_proj[None, :].astype(jnp.float32)             # (1, C)

    kernel = functools.partial(_attention_kernel, num_heads=num_heads)

    out = pl.pallas_call(
        kernel,
        out_shape=jax.ShapeDtypeStruct((B, N, C), x.dtype),
        grid_spec=pltpu.PrefetchScalarGridSpec(
            num_scalar_prefetch=0,
            grid=(B,),
            in_specs=[
                pl.BlockSpec((1, N, C), lambda b: (b, 0, 0)),   # x: per-batch block
                pl.BlockSpec((C, 3 * C), lambda b: (0, 0)),     # fused W_qkv^T (resident)
                pl.BlockSpec((C, C), lambda b: (0, 0)),         # W_proj^T (resident)
                pl.BlockSpec((1, C), lambda b: (0, 0)),         # b_proj (resident)
            ],
            out_specs=pl.BlockSpec((1, N, C), lambda b: (b, 0, 0)),
        ),
        compiler_params=pltpu.CompilerParams(
            dimension_semantics=("parallel",)),                  # megacore-shardable on v7x
    )(x, wqkv_t, wproj_t, bp)
    return out


# ----------------------- pure-JAX reference (for checking) -----------------------
def ref_forward(x, params, *, num_heads):
    B, N, C = x.shape
    hd = C // num_heads
    scale = hd ** -0.5
    qkv = x @ params["w_qkv"].T                                 # (B, N, 3C), no bias
    qkv = qkv.reshape(B, N, 3, num_heads, hd).transpose(2, 0, 3, 1, 4)
    q, k, v = qkv[0], qkv[1], qkv[2]
    attn = jnp.einsum("bhqd,bhkd->bhqk", q, k) * scale
    attn = jax.nn.softmax(attn, axis=-1)
    out = jnp.einsum("bhqk,bhkd->bhqd", attn, v)
    out = out.transpose(0, 2, 1, 3).reshape(B, N, C)
    return out @ params["w_proj"].T + params["b_proj"]


def init_params(key, dim):
    ks = jax.random.split(key, 3)
    bound = 1.0 / (dim ** 0.5)
    w_qkv = jax.random.uniform(ks[0], (3 * dim, dim), jnp.float32, -bound, bound)
    w_proj = jax.random.uniform(ks[1], (dim, dim), jnp.float32, -bound, bound)
    b_proj = jax.random.uniform(ks[2], (dim,), jnp.float32, -bound, bound)
    return dict(w_qkv=w_qkv, w_proj=w_proj, b_proj=b_proj)


if __name__ == "__main__":
    B, N, C, H = 2, 8, 32, 8          # batch, seq_length, dim, num_heads

    key = jax.random.PRNGKey(0)
    kx, kp = jax.random.split(key)
    x = jax.random.normal(kx, (B, N, C), jnp.float32)
    params = init_params(kp, C)

    out = attention_forward(x, params, num_heads=H)
    out = jax.block_until_ready(out)

    ref = ref_forward(x, params, num_heads=H)
    assert out.shape == (B, N, C)
    # bf16 matmul operands (~4e-3 relative) + approx reciprocal (~1e-4) bound the
    # error; softmax/accumulation are f32, so 2e-2 is a comfortable tolerance.
    assert jnp.allclose(out, ref, atol=2e-2, rtol=2e-2), "kernel/reference mismatch"
    print("KERNEL_OK")
</pallas_src>

<mosaic_0001>
module attributes {stable_mosaic.version = 11 : i64} {
  func.func @_attention_kernel(%arg0: i32, %arg1: memref<1x8x32xf32, #tpu.memory_space<vmem>>, %arg2: memref<32x96xbf16, #tpu.memory_space<vmem>>, %arg3: memref<32x32xbf16, #tpu.memory_space<vmem>>, %arg4: memref<1x32xf32, #tpu.memory_space<vmem>>, %arg5: memref<1x8x32xf32, #tpu.memory_space<vmem>>) attributes {dimension_semantics = [#tpu.dimension_semantics<parallel>], iteration_bounds = array<i64: 2>, scalar_prefetch = 0 : i64, scratch_operands = 0 : i64, tpu.core_type = #tpu.core_type<tc>, window_params = [{transform_indices = @transform_0, window_bounds = array<i64: 1, 8, 32>}, {pipeline_mode = #tpu.pipeline_mode<synchronous>, transform_indices = @transform_1, window_bounds = array<i64: 32, 96>}, {pipeline_mode = #tpu.pipeline_mode<synchronous>, transform_indices = @transform_2, window_bounds = array<i64: 32, 32>}, {pipeline_mode = #tpu.pipeline_mode<synchronous>, transform_indices = @transform_3, window_bounds = array<i64: 1, 32>}, {transform_indices = @transform_4, window_bounds = array<i64: 1, 8, 32>}]} {
    %c0 = arith.constant 0 : index
    %c0_0 = arith.constant 0 : index
    %c0_1 = arith.constant 0 : index
    %0 = vector.load %arg1[%c0, %c0_0, %c0_1] : memref<1x8x32xf32, #tpu.memory_space<vmem>>, vector<1x8x32xf32>
    %1 = vector.shape_cast %0 : vector<1x8x32xf32> to vector<8x32xf32>
    %2 = arith.truncf %1 : vector<8x32xf32> to vector<8x32xbf16>
    %c0_2 = arith.constant 0 : index
    %c0_3 = arith.constant 0 : index
    %3 = vector.load %arg2[%c0_2, %c0_3] : memref<32x96xbf16, #tpu.memory_space<vmem>>, vector<32x96xbf16>
    %cst = arith.constant dense<0.000000e+00> : vector<8x96xf32>
    %4 = tpu.matmul %2, %3, %cst {dimension_numbers = #tpu.dot_dimension_numbers<[1], [0], [0], [1], [0, 0, 1, 1], [], []>} : vector<8x32xbf16>, vector<32x96xbf16>, vector<8x96xf32> -> vector<8x96xf32>
    %cst_4 = arith.constant 0.000000e+00 : f32
    %5 = vector.broadcast %cst_4 : f32 to vector<8x32xf32>
    %6 = vector.extract_strided_slice %4 {offsets = [0, 0], sizes = [8, 4], strides = [1, 1]} : vector<8x96xf32> to vector<8x4xf32>
    %7 = vector.extract_strided_slice %4 {offsets = [0, 4], sizes = [8, 4], strides = [1, 1]} : vector<8x96xf32> to vector<8x4xf32>
    %8 = vector.extract_strided_slice %4 {offsets = [0, 8], sizes = [8, 4], strides = [1, 1]} : vector<8x96xf32> to vector<8x4xf32>
    %9 = arith.truncf %6 : vector<8x4xf32> to vector<8x4xbf16>
    %10 = arith.truncf %7 : vector<8x4xf32> to vector<8x4xbf16>
    %cst_5 = arith.constant dense<0.000000e+00> : vector<8x8xf32>
    %11 = tpu.matmul %9, %10, %cst_5 {dimension_numbers = #tpu.dot_dimension_numbers<[1], [1], [0], [0], [0, 0, 1, 0], [], []>} : vector<8x4xbf16>, vector<8x4xbf16>, vector<8x8xf32> -> vector<8x8xf32>
    %cst_6 = arith.constant dense<0xFF800000> : vector<8xf32>
    %12 = vector.multi_reduction <maximumf>, %11, %cst_6 [1] : vector<8x8xf32> to vector<8xf32>
    %13 = vector.shape_cast %12 : vector<8xf32> to vector<8x1xf32>
    %14 = vector.broadcast %13 : vector<8x1xf32> to vector<8x8xf32>
    %15 = arith.subf %11, %14 : vector<8x8xf32>
    %16 = math.exp %15 : vector<8x8xf32>
    %cst_7 = arith.constant dense<0.000000e+00> : vector<8xf32>
    %17 = vector.multi_reduction <add>, %16, %cst_7 [1] : vector<8x8xf32> to vector<8xf32>
    %18 = vector.shape_cast %17 : vector<8xf32> to vector<8x1xf32>
    %19 = tpu.reciprocal %18 {approx = true} : vector<8x1xf32> -> vector<8x1xf32>
    %20 = vector.broadcast %19 : vector<8x1xf32> to vector<8x8xf32>
    %21 = arith.mulf %16, %20 : vector<8x8xf32>
    %22 = arith.truncf %21 : vector<8x8xf32> to vector<8x8xbf16>
    %23 = arith.truncf %8 : vector<8x4xf32> to vector<8x4xbf16>
    %cst_8 = arith.constant dense<0.000000e+00> : vector<8x4xf32>
    %24 = tpu.matmul %22, %23, %cst_8 {dimension_numbers = #tpu.dot_dimension_numbers<[1], [0], [0], [1], [0, 0, 1, 1], [], []>} : vector<8x8xbf16>, vector<8x4xbf16>, vector<8x4xf32> -> vector<8x4xf32>
    %25 = arith.truncf %24 : vector<8x4xf32> to vector<8x4xbf16>
    %c0_9 = arith.constant 0 : index
    %c0_10 = arith.constant 0 : index
    %26 = vector.load %arg3[%c0_9, %c0_10] : memref<32x32xbf16, #tpu.memory_space<vmem>>, vector<4x32xbf16>
    %cst_11 = arith.constant dense<0.000000e+00> : vector<8x32xf32>
    %27 = tpu.matmul %25, %26, %cst_11 {dimension_numbers = #tpu.dot_dimension_numbers<[1], [0], [0], [1], [0, 0, 1, 1], [], []>} : vector<8x4xbf16>, vector<4x32xbf16>, vector<8x32xf32> -> vector<8x32xf32>
    %28 = arith.addf %5, %27 : vector<8x32xf32>
    %29 = vector.extract_strided_slice %4 {offsets = [0, 12], sizes = [8, 4], strides = [1, 1]} : vector<8x96xf32> to vector<8x4xf32>
    %30 = vector.extract_strided_slice %4 {offsets = [0, 16], sizes = [8, 4], strides = [1, 1]} : vector<8x96xf32> to vector<8x4xf32>
    %31 = vector.extract_strided_slice %4 {offsets = [0, 20], sizes = [8, 4], strides = [1, 1]} : vector<8x96xf32> to vector<8x4xf32>
    %32 = arith.truncf %29 : vector<8x4xf32> to vector<8x4xbf16>
    %33 = arith.truncf %30 : vector<8x4xf32> to vector<8x4xbf16>
    %cst_12 = arith.constant dense<0.000000e+00> : vector<8x8xf32>
    %34 = tpu.matmul %32, %33, %cst_12 {dimension_numbers = #tpu.dot_dimension_numbers<[1], [1], [0], [0], [0, 0, 1, 0], [], []>} : vector<8x4xbf16>, vector<8x4xbf16>, vector<8x8xf32> -> vector<8x8xf32>
    %cst_13 = arith.constant dense<0xFF800000> : vector<8xf32>
    %35 = vector.multi_reduction <maximumf>, %34, %cst_13 [1] : vector<8x8xf32> to vector<8xf32>
    %36 = vector.shape_cast %35 : vector<8xf32> to vector<8x1xf32>
    %37 = vector.broadcast %36 : vector<8x1xf32> to vector<8x8xf32>
    %38 = arith.subf %34, %37 : vector<8x8xf32>
    %39 = math.exp %38 : vector<8x8xf32>
    %cst_14 = arith.constant dense<0.000000e+00> : vector<8xf32>
    %40 = vector.multi_reduction <add>, %39, %cst_14 [1] : vector<8x8xf32> to vector<8xf32>
    %41 = vector.shape_cast %40 : vector<8xf32> to vector<8x1xf32>
    %42 = tpu.reciprocal %41 {approx = true} : vector<8x1xf32> -> vector<8x1xf32>
    %43 = vector.broadcast %42 : vector<8x1xf32> to vector<8x8xf32>
    %44 = arith.mulf %39, %43 : vector<8x8xf32>
    %45 = arith.truncf %44 : vector<8x8xf32> to vector<8x8xbf16>
    %46 = arith.truncf %31 : vector<8x4xf32> to vector<8x4xbf16>
    %cst_15 = arith.constant dense<0.000000e+00> : vector<8x4xf32>
    %47 = tpu.matmul %45, %46, %cst_15 {dimension_numbers = #tpu.dot_dimension_numbers<[1], [0], [0], [1], [0, 0, 1, 1], [], []>} : vector<8x8xbf16>, vector<8x4xbf16>, vector<8x4xf32> -> vector<8x4xf32>
    %48 = arith.truncf %47 : vector<8x4xf32> to vector<8x4xbf16>
    %c4 = arith.constant 4 : index
    %c0_16 = arith.constant 0 : index
    %49 = vector.load %arg3[%c4, %c0_16] : memref<32x32xbf16, #tpu.memory_space<vmem>>, vector<4x32xbf16>
    %cst_17 = arith.constant dense<0.000000e+00> : vector<8x32xf32>
    %50 = tpu.matmul %48, %49, %cst_17 {dimension_numbers = #tpu.dot_dimension_numbers<[1], [0], [0], [1], [0, 0, 1, 1], [], []>} : vector<8x4xbf16>, vector<4x32xbf16>, vector<8x32xf32> -> vector<8x32xf32>
    %51 = arith.addf %28, %50 : vector<8x32xf32>
    %52 = vector.extract_strided_slice %4 {offsets = [0, 24], sizes = [8, 4], strides = [1, 1]} : vector<8x96xf32> to vector<8x4xf32>
    %53 = vector.extract_strided_slice %4 {offsets = [0, 28], sizes = [8, 4], strides = [1, 1]} : vector<8x96xf32> to vector<8x4xf32>
    %54 = vector.extract_strided_slice %4 {offsets = [0, 32], sizes = [8, 4], strides = [1, 1]} : vector<8x96xf32> to vector<8x4xf32>
    %55 = arith.truncf %52 : vector<8x4xf32> to vector<8x4xbf16>
    %56 = arith.truncf %53 : vector<8x4xf32> to vector<8x4xbf16>
    %cst_18 = arith.constant dense<0.000000e+00> : vector<8x8xf32>
    %57 = tpu.matmul %55, %56, %cst_18 {dimension_numbers = #tpu.dot_dimension_numbers<[1], [1], [0], [0], [0, 0, 1, 0], [], []>} : vector<8x4xbf16>, vector<8x4xbf16>, vector<8x8xf32> -> vector<8x8xf32>
    %cst_19 = arith.constant dense<0xFF800000> : vector<8xf32>
    %58 = vector.multi_reduction <maximumf>, %57, %cst_19 [1] : vector<8x8xf32> to vector<8xf32>
    %59 = vector.shape_cast %58 : vector<8xf32> to vector<8x1xf32>
    %60 = vector.broadcast %59 : vector<8x1xf32> to vector<8x8xf32>
    %61 = arith.subf %57, %60 : vector<8x8xf32>
    %62 = math.exp %61 : vector<8x8xf32>
    %cst_20 = arith.constant dense<0.000000e+00> : vector<8xf32>
    %63 = vector.multi_reduction <add>, %62, %cst_20 [1] : vector<8x8xf32> to vector<8xf32>
    %64 = vector.shape_cast %63 : vector<8xf32> to vector<8x1xf32>
    %65 = tpu.reciprocal %64 {approx = true} : vector<8x1xf32> -> vector<8x1xf32>
    %66 = vector.broadcast %65 : vector<8x1xf32> to vector<8x8xf32>
    %67 = arith.mulf %62, %66 : vector<8x8xf32>
    %68 = arith.truncf %67 : vector<8x8xf32> to vector<8x8xbf16>
    %69 = arith.truncf %54 : vector<8x4xf32> to vector<8x4xbf16>
    %cst_21 = arith.constant dense<0.000000e+00> : vector<8x4xf32>
    %70 = tpu.matmul %68, %69, %cst_21 {dimension_numbers = #tpu.dot_dimension_numbers<[1], [0], [0], [1], [0, 0, 1, 1], [], []>} : vector<8x8xbf16>, vector<8x4xbf16>, vector<8x4xf32> -> vector<8x4xf32>
    %71 = arith.truncf %70 : vector<8x4xf32> to vector<8x4xbf16>
    %c8 = arith.constant 8 : index
    %c0_22 = arith.constant 0 : index
    %72 = vector.load %arg3[%c8, %c0_22] : memref<32x32xbf16, #tpu.memory_space<vmem>>, vector<4x32xbf16>
    %cst_23 = arith.constant dense<0.000000e+00> : vector<8x32xf32>
    %73 = tpu.matmul %71, %72, %cst_23 {dimension_numbers = #tpu.dot_dimension_numbers<[1], [0], [0], [1], [0, 0, 1, 1], [], []>} : vector<8x4xbf16>, vector<4x32xbf16>, vector<8x32xf32> -> vector<8x32xf32>
    %74 = arith.addf %51, %73 : vector<8x32xf32>
    %75 = vector.extract_strided_slice %4 {offsets = [0, 36], sizes = [8, 4], strides = [1, 1]} : vector<8x96xf32> to vector<8x4xf32>
    %76 = vector.extract_strided_slice %4 {offsets = [0, 40], sizes = [8, 4], strides = [1, 1]} : vector<8x96xf32> to vector<8x4xf32>
    %77 = vector.extract_strided_slice %4 {offsets = [0, 44], sizes = [8, 4], strides = [1, 1]} : vector<8x96xf32> to vector<8x4xf32>
    %78 = arith.truncf %75 : vector<8x4xf32> to vector<8x4xbf16>
    %79 = arith.truncf %76 : vector<8x4xf32> to vector<8x4xbf16>
    %cst_24 = arith.constant dense<0.000000e+00> : vector<8x8xf32>
    %80 = tpu.matmul %78, %79, %cst_24 {dimension_numbers = #tpu.dot_dimension_numbers<[1], [1], [0], [0], [0, 0, 1, 0], [], []>} : vector<8x4xbf16>, vector<8x4xbf16>, vector<8x8xf32> -> vector<8x8xf32>
    %cst_25 = arith.constant dense<0xFF800000> : vector<8xf32>
    %81 = vector.multi_reduction <maximumf>, %80, %cst_25 [1] : vector<8x8xf32> to vector<8xf32>
    %82 = vector.shape_cast %81 : vector<8xf32> to vector<8x1xf32>
    %83 = vector.broadcast %82 : vector<8x1xf32> to vector<8x8xf32>
    %84 = arith.subf %80, %83 : vector<8x8xf32>
    %85 = math.exp %84 : vector<8x8xf32>
    %cst_26 = arith.constant dense<0.000000e+00> : vector<8xf32>
    %86 = vector.multi_reduction <add>, %85, %cst_26 [1] : vector<8x8xf32> to vector<8xf32>
    %87 = vector.shape_cast %86 : vector<8xf32> to vector<8x1xf32>
    %88 = tpu.reciprocal %87 {approx = true} : vector<8x1xf32> -> vector<8x1xf32>
    %89 = vector.broadcast %88 : vector<8x1xf32> to vector<8x8xf32>
    %90 = arith.mulf %85, %89 : vector<8x8xf32>
    %91 = arith.truncf %90 : vector<8x8xf32> to vector<8x8xbf16>
    %92 = arith.truncf %77 : vector<8x4xf32> to vector<8x4xbf16>
    %cst_27 = arith.constant dense<0.000000e+00> : vector<8x4xf32>
    %93 = tpu.matmul %91, %92, %cst_27 {dimension_numbers = #tpu.dot_dimension_numbers<[1], [0], [0], [1], [0, 0, 1, 1], [], []>} : vector<8x8xbf16>, vector<8x4xbf16>, vector<8x4xf32> -> vector<8x4xf32>
    %94 = arith.truncf %93 : vector<8x4xf32> to vector<8x4xbf16>
    %c12 = arith.constant 12 : index
    %c0_28 = arith.constant 0 : index
    %95 = vector.load %arg3[%c12, %c0_28] : memref<32x32xbf16, #tpu.memory_space<vmem>>, vector<4x32xbf16>
    %cst_29 = arith.constant dense<0.000000e+00> : vector<8x32xf32>
    %96 = tpu.matmul %94, %95, %cst_29 {dimension_numbers = #tpu.dot_dimension_numbers<[1], [0], [0], [1], [0, 0, 1, 1], [], []>} : vector<8x4xbf16>, vector<4x32xbf16>, vector<8x32xf32> -> vector<8x32xf32>
    %97 = arith.addf %74, %96 : vector<8x32xf32>
    %98 = vector.extract_strided_slice %4 {offsets = [0, 48], sizes = [8, 4], strides = [1, 1]} : vector<8x96xf32> to vector<8x4xf32>
    %99 = vector.extract_strided_slice %4 {offsets = [0, 52], sizes = [8, 4], strides = [1, 1]} : vector<8x96xf32> to vector<8x4xf32>
    %100 = vector.extract_strided_slice %4 {offsets = [0, 56], sizes = [8, 4], strides = [1, 1]} : vector<8x96xf32> to vector<8x4xf32>
    %101 = arith.truncf %98 : vector<8x4xf32> to vector<8x4xbf16>
    %102 = arith.truncf %99 : vector<8x4xf32> to vector<8x4xbf16>
    %cst_30 = arith.constant dense<0.000000e+00> : vector<8x8xf32>
    %103 = tpu.matmul %101, %102, %cst_30 {dimension_numbers = #tpu.dot_dimension_numbers<[1], [1], [0], [0], [0, 0, 1, 0], [], []>} : vector<8x4xbf16>, vector<8x4xbf16>, vector<8x8xf32> -> vector<8x8xf32>
    %cst_31 = arith.constant dense<0xFF800000> : vector<8xf32>
    %104 = vector.multi_reduction <maximumf>, %103, %cst_31 [1] : vector<8x8xf32> to vector<8xf32>
    %105 = vector.shape_cast %104 : vector<8xf32> to vector<8x1xf32>
    %106 = vector.broadcast %105 : vector<8x1xf32> to vector<8x8xf32>
    %107 = arith.subf %103, %106 : vector<8x8xf32>
    %108 = math.exp %107 : vector<8x8xf32>
    %cst_32 = arith.constant dense<0.000000e+00> : vector<8xf32>
    %109 = vector.multi_reduction <add>, %108, %cst_32 [1] : vector<8x8xf32> to vector<8xf32>
    %110 = vector.shape_cast %109 : vector<8xf32> to vector<8x1xf32>
    %111 = tpu.reciprocal %110 {approx = true} : vector<8x1xf32> -> vector<8x1xf32>
    %112 = vector.broadcast %111 : vector<8x1xf32> to vector<8x8xf32>
    %113 = arith.mulf %108, %112 : vector<8x8xf32>
    %114 = arith.truncf %113 : vector<8x8xf32> to vector<8x8xbf16>
    %115 = arith.truncf %100 : vector<8x4xf32> to vector<8x4xbf16>
    %cst_33 = arith.constant dense<0.000000e+00> : vector<8x4xf32>
    %116 = tpu.matmul %114, %115, %cst_33 {dimension_numbers = #tpu.dot_dimension_numbers<[1], [0], [0], [1], [0, 0, 1, 1], [], []>} : vector<8x8xbf16>, vector<8x4xbf16>, vector<8x4xf32> -> vector<8x4xf32>
    %117 = arith.truncf %116 : vector<8x4xf32> to vector<8x4xbf16>
    %c16 = arith.constant 16 : index
    %c0_34 = arith.constant 0 : index
    %118 = vector.load %arg3[%c16, %c0_34] : memref<32x32xbf16, #tpu.memory_space<vmem>>, vector<4x32xbf16>
    %cst_35 = arith.constant dense<0.000000e+00> : vector<8x32xf32>
    %119 = tpu.matmul %117, %118, %cst_35 {dimension_numbers = #tpu.dot_dimension_numbers<[1], [0], [0], [1], [0, 0, 1, 1], [], []>} : vector<8x4xbf16>, vector<4x32xbf16>, vector<8x32xf32> -> vector<8x32xf32>
    %120 = arith.addf %97, %119 : vector<8x32xf32>
    %121 = vector.extract_strided_slice %4 {offsets = [0, 60], sizes = [8, 4], strides = [1, 1]} : vector<8x96xf32> to vector<8x4xf32>
    %122 = vector.extract_strided_slice %4 {offsets = [0, 64], sizes = [8, 4], strides = [1, 1]} : vector<8x96xf32> to vector<8x4xf32>
    %123 = vector.extract_strided_slice %4 {offsets = [0, 68], sizes = [8, 4], strides = [1, 1]} : vector<8x96xf32> to vector<8x4xf32>
    %124 = arith.truncf %121 : vector<8x4xf32> to vector<8x4xbf16>
    %125 = arith.truncf %122 : vector<8x4xf32> to vector<8x4xbf16>
    %cst_36 = arith.constant dense<0.000000e+00> : vector<8x8xf32>
    %126 = tpu.matmul %124, %125, %cst_36 {dimension_numbers = #tpu.dot_dimension_numbers<[1], [1], [0], [0], [0, 0, 1, 0], [], []>} : vector<8x4xbf16>, vector<8x4xbf16>, vector<8x8xf32> -> vector<8x8xf32>
    %cst_37 = arith.constant dense<0xFF800000> : vector<8xf32>
    %127 = vector.multi_reduction <maximumf>, %126, %cst_37 [1] : vector<8x8xf32> to vector<8xf32>
    %128 = vector.shape_cast %127 : vector<8xf32> to vector<8x1xf32>
    %129 = vector.broadcast %128 : vector<8x1xf32> to vector<8x8xf32>
    %130 = arith.subf %126, %129 : vector<8x8xf32>
    %131 = math.exp %130 : vector<8x8xf32>
    %cst_38 = arith.constant dense<0.000000e+00> : vector<8xf32>
    %132 = vector.multi_reduction <add>, %131, %cst_38 [1] : vector<8x8xf32> to vector<8xf32>
    %133 = vector.shape_cast %132 : vector<8xf32> to vector<8x1xf32>
    %134 = tpu.reciprocal %133 {approx = true} : vector<8x1xf32> -> vector<8x1xf32>
    %135 = vector.broadcast %134 : vector<8x1xf32> to vector<8x8xf32>
    %136 = arith.mulf %131, %135 : vector<8x8xf32>
    %137 = arith.truncf %136 : vector<8x8xf32> to vector<8x8xbf16>
    %138 = arith.truncf %123 : vector<8x4xf32> to vector<8x4xbf16>
    %cst_39 = arith.constant dense<0.000000e+00> : vector<8x4xf32>
    %139 = tpu.matmul %137, %138, %cst_39 {dimension_numbers = #tpu.dot_dimension_numbers<[1], [0], [0], [1], [0, 0, 1, 1], [], []>} : vector<8x8xbf16>, vector<8x4xbf16>, vector<8x4xf32> -> vector<8x4xf32>
    %140 = arith.truncf %139 : vector<8x4xf32> to vector<8x4xbf16>
    %c20 = arith.constant 20 : index
    %c0_40 = arith.constant 0 : index
    %141 = vector.load %arg3[%c20, %c0_40] : memref<32x32xbf16, #tpu.memory_space<vmem>>, vector<4x32xbf16>
    %cst_41 = arith.constant dense<0.000000e+00> : vector<8x32xf32>
    %142 = tpu.matmul %140, %141, %cst_41 {dimension_numbers = #tpu.dot_dimension_numbers<[1], [0], [0], [1], [0, 0, 1, 1], [], []>} : vector<8x4xbf16>, vector<4x32xbf16>, vector<8x32xf32> -> vector<8x32xf32>
    %143 = arith.addf %120, %142 : vector<8x32xf32>
    %144 = vector.extract_strided_slice %4 {offsets = [0, 72], sizes = [8, 4], strides = [1, 1]} : vector<8x96xf32> to vector<8x4xf32>
    %145 = vector.extract_strided_slice %4 {offsets = [0, 76], sizes = [8, 4], strides = [1, 1]} : vector<8x96xf32> to vector<8x4xf32>
    %146 = vector.extract_strided_slice %4 {offsets = [0, 80], sizes = [8, 4], strides = [1, 1]} : vector<8x96xf32> to vector<8x4xf32>
    %147 = arith.truncf %144 : vector<8x4xf32> to vector<8x4xbf16>
    %148 = arith.truncf %145 : vector<8x4xf32> to vector<8x4xbf16>
    %cst_42 = arith.constant dense<0.000000e+00> : vector<8x8xf32>
    %149 = tpu.matmul %147, %148, %cst_42 {dimension_numbers = #tpu.dot_dimension_numbers<[1], [1], [0], [0], [0, 0, 1, 0], [], []>} : vector<8x4xbf16>, vector<8x4xbf16>, vector<8x8xf32> -> vector<8x8xf32>
    %cst_43 = arith.constant dense<0xFF800000> : vector<8xf32>
    %150 = vector.multi_reduction <maximumf>, %149, %cst_43 [1] : vector<8x8xf32> to vector<8xf32>
    %151 = vector.shape_cast %150 : vector<8xf32> to vector<8x1xf32>
    %152 = vector.broadcast %151 : vector<8x1xf32> to vector<8x8xf32>
    %153 = arith.subf %149, %152 : vector<8x8xf32>
    %154 = math.exp %153 : vector<8x8xf32>
    %cst_44 = arith.constant dense<0.000000e+00> : vector<8xf32>
    %155 = vector.multi_reduction <add>, %154, %cst_44 [1] : vector<8x8xf32> to vector<8xf32>
    %156 = vector.shape_cast %155 : vector<8xf32> to vector<8x1xf32>
    %157 = tpu.reciprocal %156 {approx = true} : vector<8x1xf32> -> vector<8x1xf32>
    %158 = vector.broadcast %157 : vector<8x1xf32> to vector<8x8xf32>
    %159 = arith.mulf %154, %158 : vector<8x8xf32>
    %160 = arith.truncf %159 : vector<8x8xf32> to vector<8x8xbf16>
    %161 = arith.truncf %146 : vector<8x4xf32> to vector<8x4xbf16>
    %cst_45 = arith.constant dense<0.000000e+00> : vector<8x4xf32>
    %162 = tpu.matmul %160, %161, %cst_45 {dimension_numbers = #tpu.dot_dimension_numbers<[1], [0], [0], [1], [0, 0, 1, 1], [], []>} : vector<8x8xbf16>, vector<8x4xbf16>, vector<8x4xf32> -> vector<8x4xf32>
    %163 = arith.truncf %162 : vector<8x4xf32> to vector<8x4xbf16>
    %c24 = arith.constant 24 : index
    %c0_46 = arith.constant 0 : index
    %164 = vector.load %arg3[%c24, %c0_46] : memref<32x32xbf16, #tpu.memory_space<vmem>>, vector<4x32xbf16>
    %cst_47 = arith.constant dense<0.000000e+00> : vector<8x32xf32>
    %165 = tpu.matmul %163, %164, %cst_47 {dimension_numbers = #tpu.dot_dimension_numbers<[1], [0], [0], [1], [0, 0, 1, 1], [], []>} : vector<8x4xbf16>, vector<4x32xbf16>, vector<8x32xf32> -> vector<8x32xf32>
    %166 = arith.addf %143, %165 : vector<8x32xf32>
    %167 = vector.extract_strided_slice %4 {offsets = [0, 84], sizes = [8, 4], strides = [1, 1]} : vector<8x96xf32> to vector<8x4xf32>
    %168 = vector.extract_strided_slice %4 {offsets = [0, 88], sizes = [8, 4], strides = [1, 1]} : vector<8x96xf32> to vector<8x4xf32>
    %169 = vector.extract_strided_slice %4 {offsets = [0, 92], sizes = [8, 4], strides = [1, 1]} : vector<8x96xf32> to vector<8x4xf32>
    %170 = arith.truncf %167 : vector<8x4xf32> to vector<8x4xbf16>
    %171 = arith.truncf %168 : vector<8x4xf32> to vector<8x4xbf16>
    %cst_48 = arith.constant dense<0.000000e+00> : vector<8x8xf32>
    %172 = tpu.matmul %170, %171, %cst_48 {dimension_numbers = #tpu.dot_dimension_numbers<[1], [1], [0], [0], [0, 0, 1, 0], [], []>} : vector<8x4xbf16>, vector<8x4xbf16>, vector<8x8xf32> -> vector<8x8xf32>
    %cst_49 = arith.constant dense<0xFF800000> : vector<8xf32>
    %173 = vector.multi_reduction <maximumf>, %172, %cst_49 [1] : vector<8x8xf32> to vector<8xf32>
    %174 = vector.shape_cast %173 : vector<8xf32> to vector<8x1xf32>
    %175 = vector.broadcast %174 : vector<8x1xf32> to vector<8x8xf32>
    %176 = arith.subf %172, %175 : vector<8x8xf32>
    %177 = math.exp %176 : vector<8x8xf32>
    %cst_50 = arith.constant dense<0.000000e+00> : vector<8xf32>
    %178 = vector.multi_reduction <add>, %177, %cst_50 [1] : vector<8x8xf32> to vector<8xf32>
    %179 = vector.shape_cast %178 : vector<8xf32> to vector<8x1xf32>
    %180 = tpu.reciprocal %179 {approx = true} : vector<8x1xf32> -> vector<8x1xf32>
    %181 = vector.broadcast %180 : vector<8x1xf32> to vector<8x8xf32>
    %182 = arith.mulf %177, %181 : vector<8x8xf32>
    %183 = arith.truncf %182 : vector<8x8xf32> to vector<8x8xbf16>
    %184 = arith.truncf %169 : vector<8x4xf32> to vector<8x4xbf16>
    %cst_51 = arith.constant dense<0.000000e+00> : vector<8x4xf32>
    %185 = tpu.matmul %183, %184, %cst_51 {dimension_numbers = #tpu.dot_dimension_numbers<[1], [0], [0], [1], [0, 0, 1, 1], [], []>} : vector<8x8xbf16>, vector<8x4xbf16>, vector<8x4xf32> -> vector<8x4xf32>
    %186 = arith.truncf %185 : vector<8x4xf32> to vector<8x4xbf16>
    %c28 = arith.constant 28 : index
    %c0_52 = arith.constant 0 : index
    %187 = vector.load %arg3[%c28, %c0_52] : memref<32x32xbf16, #tpu.memory_space<vmem>>, vector<4x32xbf16>
    %cst_53 = arith.constant dense<0.000000e+00> : vector<8x32xf32>
    %188 = tpu.matmul %186, %187, %cst_53 {dimension_numbers = #tpu.dot_dimension_numbers<[1], [0], [0], [1], [0, 0, 1, 1], [], []>} : vector<8x4xbf16>, vector<4x32xbf16>, vector<8x32xf32> -> vector<8x32xf32>
    %189 = arith.addf %166, %188 : vector<8x32xf32>
    %c0_54 = arith.constant 0 : index
    %c0_55 = arith.constant 0 : index
    %190 = vector.load %arg4[%c0_54, %c0_55] : memref<1x32xf32, #tpu.memory_space<vmem>>, vector<1x32xf32>
    %191 = vector.broadcast %190 : vector<1x32xf32> to vector<8x32xf32>
    %192 = arith.addf %189, %191 : vector<8x32xf32>
    %c0_56 = arith.constant 0 : index
    %c0_57 = arith.constant 0 : index
    %c0_58 = arith.constant 0 : index
    %193 = vector.load %arg5[%c0_56, %c0_57, %c0_58] : memref<1x8x32xf32, #tpu.memory_space<vmem>>, vector<1x8x32xf32>
    %194 = vector.shape_cast %193 : vector<1x8x32xf32> to vector<8x32xf32>
    %195 = vector.shape_cast %192 : vector<8x32xf32> to vector<1x8x32xf32>
    tpu.vector_store %arg5[%c0_56, %c0_57, %c0_58], %195 {strides = array<i32>} : memref<1x8x32xf32, #tpu.memory_space<vmem>>, vector<1x8x32xf32>,
    return
  }
  func.func @transform_0(%arg0: i32) -> (i32, i32, i32) {
    %c0_i32 = arith.constant 0 : i32
    %c0_i32_0 = arith.constant 0 : i32
    %c0_i32_1 = arith.constant 0 : i32
    return %arg0, %c0_i32, %c0_i32_0 : i32, i32, i32
  }
  func.func @transform_1(%arg0: i32) -> (i32, i32) {
    %c0_i32 = arith.constant 0 : i32
    %c0_i32_0 = arith.constant 0 : i32
    %c0_i32_1 = arith.constant 0 : i32
    return %c0_i32, %c0_i32_0 : i32, i32
  }
  func.func @transform_2(%arg0: i32) -> (i32, i32) {
    %c0_i32 = arith.constant 0 : i32
    %c0_i32_0 = arith.constant 0 : i32
    %c0_i32_1 = arith.constant 0 : i32
    return %c0_i32, %c0_i32_0 : i32, i32
  }
  func.func @transform_3(%arg0: i32) -> (i32, i32) {
    %c0_i32 = arith.constant 0 : i32
    %c0_i32_0 = arith.constant 0 : i32
    %c0_i32_1 = arith.constant 0 : i32
    return %c0_i32, %c0_i32_0 : i32, i32
  }
  func.func @transform_4(%arg0: i32) -> (i32, i32, i32) {
    %c0_i32 = arith.constant 0 : i32
    %c0_i32_0 = arith.constant 0 : i32
    %c0_i32_1 = arith.constant 0 : i32
    return %arg0, %c0_i32, %c0_i32_0 : i32, i32, i32
  }
}

</mosaic_0001>

<llo_original>
// kernel: tpu_custom_call.1
$region0: #{tpu_custom_call.1}
  #allocation0 [shape = 'u32[]', space=smem, size = 0x4, offset = 0x4, fixed_abs, tag = 'smem constant byte address 0x4 - core index']
  #allocation1 [shape = 'u32[144,128]{1,0:T(1,128)}', space=vmem, size = 0x12000, scoped, tag = 'internal scratch']
  %s0 = inlined_call_operand.hbm [shape: f32[2,8,32], index: 0, kind: input, shape index: {}]
  %s1 = inlined_call_operand.hbm [shape: bf16[32,96], index: 1, kind: input, shape index: {}]
  %s2 = inlined_call_operand.hbm [shape: bf16[32,32], index: 2, kind: input, shape index: {}]
  %s3 = inlined_call_operand.vmem [shape: f32[1,32], index: 3, kind: input, shape index: {}]
  %s4 = inlined_call_operand.hbm [shape: f32[2,8,32], index: 4, kind: output, shape index: {}]
  %s5 = sld [smem:[#allocation0]]
  $region61: #{tpu_custom_call.1} parent=0
    _
  %s7 = ssub.s32 1, %s5
  %s8 = scalar_select 0, %s7, %s5
  $region1: #{tpu_custom_call.1} parent=0
    #allocation2 [shape = 'u8[8192]{0}', space=vmem, size = 0x2000, scoped, tag = 'input window, operand 0']
    #allocation3 [shape = 's32[2]{0}', space=sflag, size = 0x8, scoped, tag = 'scoped memory for tpu_custom_call.1']
    #allocation4 [shape = 's32[2]{0}', space=sflag, size = 0x8, scoped, tag = 'scoped memory for tpu_custom_call.1']
    #allocation5 [shape = 'u8[8192]{0}', space=vmem, size = 0x2000, scoped, tag = 'input window, operand 1, single buffered']
    #allocation6 [shape = 's32[1]{0}', space=sflag, size = 0x4, scoped, tag = 'scoped memory for tpu_custom_call.1']
    #allocation7 [shape = 'u8[8192]{0}', space=vmem, size = 0x2000, scoped, tag = 'input window, operand 2, single buffered']
    #allocation8 [shape = 'u8[8192]{0}', space=vmem, size = 0x2000, scoped, tag = 'output window, operand 0']
    %9 = vsyncpa [#allocation3], 0
    %s10 = scalar_lea.sflag [#allocation3], 1
    %11 = vsyncpa %s10, 0
    %12 = vsyncpa [#allocation6], 0
    %13 = vsyncpa [#allocation4], 0
    %s14 = scalar_lea.sflag [#allocation4], 1
    %15 = vsyncpa %s14, 0
    loop: start=0, step=1, limit=4
    $region2: #{tpu_custom_call.1} parent=1 // loop_pre_header
      _
    $region3: #{tpu_custom_call.1} parent=1 // loop_header
      %s17 = sphi 0, %s21
      %p18 = scmp.ge.s32.totalorder %s17, 4
      %s27 = sphi 0, %s29
      %s30 = sphi 0, %s27
      %s31 = sphi 0, %s30
      %s47 = sphi 0, %s31
      %s51 = sphi 0, %s51
      %s53 = sphi 0, %s51
      %s54 = sphi 0, %s53
      %s68 = sphi 0, %s54
      %s72 = sphi 0, %s72
      %s74 = sphi 0, %s72
      %s75 = sphi 0, %s74
      %s89 = sphi 0, %s75
      %s93 = sphi 0, %s93
      %s95 = sphi 0, %s93
      %s96 = sphi 0, %s95
      %s110 = sphi 0, %s96
      %s116 = sphi 0, %s118
      %s119 = sphi 0, %s116
      %s120 = sphi 0, %s119
      %s136 = sphi 0, %s120
    $region4: #{tpu_custom_call.1} parent=1 // loop_header_branch
      %20 = sbr.rel (%p18) target = $region8
    $region5: #{tpu_custom_call.1} parent=1 // loop_body
      %s22 = ssub.s32 %s17, 1
      %s23 = ssub.s32 %s17, 2
      %s24 = sadd.s32 %s17, 1
      %s25 = ssub.s32 %s17, %s24
      %p26 = scmp.eq.s32.totalorder %s25, 0
      %s28 = sadd.s32 %s27, 1
      %s29 = scalar_select %p26, %s27, %s28
      %p32 = pneg %p26
      %p33 = scmp.eq.s32.totalorder %s17, 1
      %p34 = por %p32, %p33
      %p35 = scmp.ne.s32.totalorder %s27, %s30
      %p36 = scmp.eq.s32.totalorder %s17, 0
      %p37 = por %p35, %p36
      %p38 = scmp.ne.s32.totalorder %s27, %s30
      %p39 = scmp.eq.s32.totalorder %s22, 1
      %p40 = por %p38, %p39
      %p41 = scmp.ne.s32.totalorder %s30, %s31
      %p42 = scmp.eq.s32.totalorder %s22, 0
      %p43 = por %p41, %p42
      %p44 = scmp.ne.s32.totalorder %s30, %s31
      %p45 = scmp.eq.s32.totalorder %s23, 1
      %p46 = por %p44, %p45
      %p48 = scmp.ne.s32.totalorder %s31, %s47
      %p49 = scmp.eq.s32.totalorder %s23, 0
      %p50 = por %p48, %p49
      %s52 = sadd.s32 %s51, 1
      %p55 = scmp.eq.s32.totalorder %s17, 1
      %p56 = scmp.ne.s32.totalorder %s51, %s53
      %p57 = scmp.eq.s32.totalorder %s17, 0
      %p58 = por %p56, %p57
      %p59 = scmp.ne.s32.totalorder %s51, %s53
      %p60 = scmp.eq.s32.totalorder %s22, 1
      %p61 = por %p59, %p60
      %p62 = scmp.ne.s32.totalorder %s53, %s54
      %p63 = scmp.eq.s32.totalorder %s22, 0
      %p64 = por %p62, %p63
      %p65 = scmp.ne.s32.totalorder %s53, %s54
      %p66 = scmp.eq.s32.totalorder %s23, 1
      %p67 = por %p65, %p66
      %p69 = scmp.ne.s32.totalorder %s54, %s68
      %p70 = scmp.eq.s32.totalorder %s23, 0
      %p71 = por %p69, %p70
      %s73 = sadd.s32 %s72, 1
      %p76 = scmp.eq.s32.totalorder %s17, 1
      %p77 = scmp.ne.s32.totalorder %s72, %s74
      %p78 = scmp.eq.s32.totalorder %s17, 0
      %p79 = por %p77, %p78
      %p80 = scmp.ne.s32.totalorder %s72, %s74
      %p81 = scmp.eq.s32.totalorder %s22, 1
      %p82 = por %p80, %p81
      %p83 = scmp.ne.s32.totalorder %s74, %s75
      %p84 = scmp.eq.s32.totalorder %s22, 0
      %p85 = por %p83, %p84
      %p86 = scmp.ne.s32.totalorder %s74, %s75
      %p87 = scmp.eq.s32.totalorder %s23, 1
      %p88 = por %p86, %p87
      %p90 = scmp.ne.s32.totalorder %s75, %s89
      %p91 = scmp.eq.s32.totalorder %s23, 0
      %p92 = por %p90, %p91
      %s94 = sadd.s32 %s93, 1
      %p97 = scmp.eq.s32.totalorder %s17, 1
      %p98 = scmp.ne.s32.totalorder %s93, %s95
      %p99 = scmp.eq.s32.totalorder %s17, 0
      %p100 = por %p98, %p99
      %p101 = scmp.ne.s32.totalorder %s93, %s95
      %p102 = scmp.eq.s32.totalorder %s22, 1
      %p103 = por %p101, %p102
      %p104 = scmp.ne.s32.totalorder %s95, %s96
      %p105 = scmp.eq.s32.totalorder %s22, 0
      %p106 = por %p104, %p105
      %p107 = scmp.ne.s32.totalorder %s95, %s96
      %p108 = scmp.eq.s32.totalorder %s23, 1
      %p109 = por %p107, %p108
      %p111 = scmp.ne.s32.totalorder %s96, %s110
      %p112 = scmp.eq.s32.totalorder %s23, 0
      %p113 = por %p111, %p112
      %s114 = ssub.s32 %s17, %s24
      %p115 = scmp.eq.s32.totalorder %s114, 0
      %s117 = sadd.s32 %s116, 1
      %s118 = scalar_select %p115, %s116, %s117
      %p121 = pneg %p115
      %p122 = scmp.eq.s32.totalorder %s17, 1
      %p123 = por %p121, %p122
      %p124 = scmp.ne.s32.totalorder %s116, %s119
      %p125 = scmp.eq.s32.totalorder %s17, 0
      %p126 = por %p124, %p125
      %p127 = scmp.ne.s32.totalorder %s116, %s119
      %p128 = scmp.eq.s32.totalorder %s22, 1
      %p129 = por %p127, %p128
      %p130 = scmp.ne.s32.totalorder %s119, %s120
      %p131 = scmp.eq.s32.totalorder %s22, 0
      %p132 = por %p130, %p131
      %p133 = scmp.ne.s32.totalorder %s119, %s120
      %p134 = scmp.eq.s32.totalorder %s23, 1
      %p135 = por %p133, %p134
      %p137 = scmp.ne.s32.totalorder %s120, %s136
      %p138 = scmp.eq.s32.totalorder %s23, 0
      %p139 = por %p137, %p138
      %p140 = scmp.le.s32.totalorder 1, %s17
      %p141 = scmp.lt.s32.totalorder %s17, 3
      %p142 = pnand %p140, %p141
      %p143 = pneg %p142
      // Predicated region
      $region9: #{tpu_custom_call.1} parent=5 // pred_check
        _
      $region10: #{tpu_custom_call.1} parent=5 // pred_check_branch
        %145 = sbr.rel (%p142) target = $region12
      $region11: #{tpu_custom_call.1} parent=5 // pred_region
        %s146 = ssub.s32 %s17, 1
        // Predicated region
        $region13: #{tpu_custom_call.1} parent=11 // pred_check
          %p147 = pneg %p64
        $region14: #{tpu_custom_call.1} parent=11 // pred_check_branch
          %149 = sbr.rel (%p147) target = $region16
        $region15: #{tpu_custom_call.1} parent=11 // pred_region
          %s151 = ssub.s32 256, 256
          %152 = vsyncadd [#allocation6], %s151
          %s153 = sshll.u32 [#allocation5], 4
          %s154 = int_to_ptr.vmem [resolvable:$true] %s153
          %159 = dma.hbm_to_vmem [thread:$0]  %s1, 256, %s154, [#allocation6], 64, 64, 4
        $region16: #{tpu_custom_call.1} parent=11 // pred_fallthru
          _
        // Predicated region
        $region17: #{tpu_custom_call.1} parent=11 // pred_check
          %p160 = pneg %p85
        $region18: #{tpu_custom_call.1} parent=11 // pred_check_branch
          %162 = sbr.rel (%p160) target = $region20
        $region19: #{tpu_custom_call.1} parent=11 // pred_region
          %s164 = ssub.s32 256, 256
          %165 = vsyncadd [#allocation6], %s164
          %s166 = sshll.u32 [#allocation7], 4
          %s167 = int_to_ptr.vmem [resolvable:$true] %s166
          %172 = dma.hbm_to_vmem [thread:$0]  %s2, 256, %s167, [#allocation6], 64, 64, 4
        $region20: #{tpu_custom_call.1} parent=11 // pred_fallthru
          _
        // Predicated region
        $region21: #{tpu_custom_call.1} parent=11 // pred_check
          %p173 = pneg %p106
        $region22: #{tpu_custom_call.1} parent=11 // pred_check_branch
          %175 = sbr.rel (%p173) target = $region24
        $region23: #{tpu_custom_call.1} parent=11 // pred_region
          _
        $region24: #{tpu_custom_call.1} parent=11 // pred_fallthru
          _
      $region12: #{tpu_custom_call.1} parent=5 // pred_fallthru
        _
      %p176 = scmp.lt.s32.totalorder %s17, 2
      // Predicated region
      $region25: #{tpu_custom_call.1} parent=5 // pred_check
        %p177 = pneg %p176
      $region26: #{tpu_custom_call.1} parent=5 // pred_check_branch
        %179 = sbr.rel (%p177) target = $region28
      $region27: #{tpu_custom_call.1} parent=5 // pred_region
        // Predicated region
        $region29: #{tpu_custom_call.1} parent=27 // pred_check
          %p180 = pneg %p37
        $region30: #{tpu_custom_call.1} parent=27 // pred_check_branch
          %182 = sbr.rel (%p180) target = $region32
        $region31: #{tpu_custom_call.1} parent=27 // pred_region
          %s183 = sand.u32 %s27, 1
          %s184 = scalar_lea.sflag [#allocation3], %s183
          %s185 = sand.u32 %s27, 1
          %s186 = smul.addr %s185, 8
          %s187 = scalar_lea.vmem [#allocation2], %s186
          %s189 = ssub.s32 128, 128
          %190 = vsyncadd %s184, %s189
          %s191 = smul.addr %s17, 128
          %s192 = scalar_lea.hbm %s0, %s191
          %s194 = sshll.u32 %s187, 4
          %s195 = int_to_ptr.vmem [resolvable:$true] %s194
          %197 = dma.hbm_to_vmem [thread:$0]  %s192, 128, %s195, %s184
        $region32: #{tpu_custom_call.1} parent=27 // pred_fallthru
          _
      $region28: #{tpu_custom_call.1} parent=5 // pred_fallthru
        _
      %p198 = scmp.le.s32.totalorder 1, %s17
      %p199 = scmp.lt.s32.totalorder %s17, 3
      %p200 = pnand %p198, %p199
      %p201 = pneg %p200
      // Predicated region
      $region33: #{tpu_custom_call.1} parent=5 // pred_check
        _
      $region34: #{tpu_custom_call.1} parent=5 // pred_check_branch
        %203 = sbr.rel (%p200) target = $region36
      $region35: #{tpu_custom_call.1} parent=5 // pred_region
        %s204 = ssub.s32 %s17, 1
        %s205 = sand.u32 %s30, 1
        %s206 = scalar_lea.sflag [#allocation3], %s205
        %s207 = sand.u32 %s30, 1
        %s208 = smul.addr %s207, 8
        %s209 = scalar_lea.vmem [#allocation2], %s208
        // Predicated region
        $region37: #{tpu_custom_call.1} parent=35 // pred_check
          %p210 = pneg %p43
        $region38: #{tpu_custom_call.1} parent=35 // pred_check_branch
          %212 = sbr.rel (%p210) target = $region40
        $region39: #{tpu_custom_call.1} parent=35 // pred_region
          %213 = dma.done %s206, 128
        $region40: #{tpu_custom_call.1} parent=35 // pred_fallthru
          _
        // Predicated region
        $region41: #{tpu_custom_call.1} parent=35 // pred_check
          %p214 = pneg %p64
        $region42: #{tpu_custom_call.1} parent=35 // pred_check_branch
          %216 = sbr.rel (%p214) target = $region44
        $region43: #{tpu_custom_call.1} parent=35 // pred_region
          %217 = dma.done [#allocation6], 256
        $region44: #{tpu_custom_call.1} parent=35 // pred_fallthru
          _
        // Predicated region
        $region45: #{tpu_custom_call.1} parent=35 // pred_check
          %p218 = pneg %p85
        $region46: #{tpu_custom_call.1} parent=35 // pred_check_branch
          %220 = sbr.rel (%p218) target = $region48
        $region47: #{tpu_custom_call.1} parent=35 // pred_region
          %221 = dma.done [#allocation6], 256
        $region48: #{tpu_custom_call.1} parent=35 // pred_fallthru
          _
        %s222 = sand.u32 %s30, 1
        %s223 = scalar_lea.sflag [#allocation3], %s222
        %s224 = sand.u32 %s30, 1
        %s225 = smul.addr %s224, 8
        %s226 = scalar_lea.vmem [#allocation2], %s225
        %p227 = pneg %p43
        %p228 = pneg %p40
        %p229 = pneg %p64
        %p230 = pneg %p61
        %p231 = pneg %p85
        %p232 = pneg %p82
        %p233 = pneg %p106
        %p234 = pneg %p103
        %p235 = pneg %p132
        %p236 = pneg %p129
        %s237 = sand.u32 %s119, 1
        %s238 = scalar_lea.sflag [#allocation4], %s237
        %s239 = sand.u32 %s119, 1
        %s240 = smul.addr %s239, 8
        %s241 = scalar_lea.vmem [#allocation8], %s240
        %v243 = vld [vmem:[%s209] sm:$0xff]
        %v244 = vpack.c.bf16 %v243, %v243
        %v245 = vld [vmem:[#allocation5] sm:$0xf]
        %v246 = vld [vmem:[#allocation5 + $0x4] sm:$0xf]
        %v247 = vld [vmem:[#allocation5 + $0x8] sm:$0xf]
        %v248 = vld [vmem:[#allocation5 + $0xc] sm:$0xf]
        %v253 = vunpack.c.l.b16 %v245
        %v254 = vunpack.c.l.b16 %v246
        %v255 = vunpack.c.l.b16 %v247
        %v256 = vunpack.c.l.b16 %v248
        %v257 = vpack.c.b16 %v254, %v253
        %v258 = vpack.c.b16 %v256, %v255
        %vm261 = vcmask 261120
        %v263 = vsel %vm261, %v244, 0
        %265 = vmatprep.subr.bf16.mxu0 0
        %266 = vmatpush1.bf16.msra.mxu0 %v257
        %267 = vmatprep.subr.bf16.mxu0 0
        %268 = vmatpush1.bf16.msra.mxu0 %v258
        %269 = vmatprep.subr.bf16.mxu0 0
        %270 = vmatpush1.bf16.msra.mxu0 0
        %271 = vmatprep.subr.bf16.mxu0 0
        %272 = vmatpush1.bf16.msra.mxu0 0
        %273 = vmatprep.subr.bf16.mxu0 0
        %274 = vmatpush1.bf16.msra.mxu0 0
        %275 = vmatprep.subr.bf16.mxu0 0
        %276 = vmatpush1.bf16.msra.mxu0 0
        %277 = vmatprep.subr.bf16.mxu0 0
        %278 = vmatpush1.bf16.msra.mxu0 0
        %279 = vmatprep.subr.bf16.mxu0 0
        %280 = vmatpush1.bf16.msra.mxu0 0
        %281 = vmatprep.subr.bf16.mxu0 0
        %282 = vmatpush1.bf16.msra.mxu0 0
        %283 = vmatprep.subr.bf16.mxu0 0
        %284 = vmatpush1.bf16.msra.mxu0 0
        %285 = vmatprep.subr.bf16.mxu0 0
        %286 = vmatpush1.bf16.msra.mxu0 0
        %287 = vmatprep.subr.bf16.mxu0 0
        %288 = vmatpush1.bf16.msra.mxu0 0
        %289 = vmatprep.subr.bf16.mxu0 0
        %290 = vmatpush1.bf16.msra.mxu0 0
        %291 = vmatprep.subr.bf16.mxu0 0
        %292 = vmatpush1.bf16.msra.mxu0 0
        %293 = vmatprep.subr.bf16.mxu0 0
        %294 = vmatpush1.bf16.msra.mxu0 0
        %295 = vmatprep.subr.bf16.mxu0 0
        %296 = vmatpush1.bf16.msra.mxu0 0
        %297 = vmatprep.mubr.bf16.mxu0 0
        %298 = vmatmul.mubr.bf16.gmra.mrb[0].mxu0 %v263
        %v299 = vpop.f32.mrb[0].mxu0
        %v300 = vadd.f32 0.0, %v299
        %v301 = vpop.f32.mrb[0].mxu0
        %v302 = vpop.f32.mrb[0].mxu0
        %v303 = vpop.f32.mrb[0].mxu0
        %304 = vdwg.mxu0
        %v305 = vpack.c.bf16 %v300, %v300
        %307 = vrot.lane.b32.xlu0 %v305, 124
        %v308 = vpop.permute.xlu0 %307
        %vm309 = vcmask 31744
        %v311 = vsel %vm309, %v305, 0
        %v314 = vsel %vm309, %v308, 0
        %316 = vmatprep.subr.bf16.mxu0 0
        %317 = vmatpush1.bf16.xpose.msra.mxu0 %v314
        %318 = vmatprep.subr.bf16.mxu0 0
        %319 = vmatpush1.bf16.xpose.msra.mxu0 0
        %320 = vmatprep.subr.bf16.mxu0 0
        %321 = vmatpush1.bf16.xpose.msra.mxu0 0
        %322 = vmatprep.subr.bf16.mxu0 0
        %323 = vmatpush1.bf16.xpose.msra.mxu0 0
        %324 = vmatprep.subr.bf16.mxu0 0
        %325 = vmatpush1.bf16.xpose.msra.mxu0 0
        %326 = vmatprep.subr.bf16.mxu0 0
        %327 = vmatpush1.bf16.xpose.msra.mxu0 0
        %328 = vmatprep.subr.bf16.mxu0 0
        %329 = vmatpush1.bf16.xpose.msra.mxu0 0
        %330 = vmatprep.subr.bf16.mxu0 0
        %331 = vmatpush1.bf16.xpose.msra.mxu0 0
        %332 = vmatprep.subr.bf16.mxu0 0
        %333 = vmatpush1.bf16.xpose.msra.mxu0 0
        %334 = vmatprep.subr.bf16.mxu0 0
        %335 = vmatpush1.bf16.xpose.msra.mxu0 0
        %336 = vmatprep.subr.bf16.mxu0 0
        %337 = vmatpush1.bf16.xpose.msra.mxu0 0
        %338 = vmatprep.subr.bf16.mxu0 0
        %339 = vmatpush1.bf16.xpose.msra.mxu0 0
        %340 = vmatprep.subr.bf16.mxu0 0
        %341 = vmatpush1.bf16.xpose.msra.mxu0 0
        %342 = vmatprep.subr.bf16.mxu0 0
        %343 = vmatpush1.bf16.xpose.msra.mxu0 0
        %344 = vmatprep.subr.bf16.mxu0 0
        %345 = vmatpush1.bf16.xpose.msra.mxu0 0
        %346 = vmatprep.subr.bf16.mxu0 0
        %347 = vmatpush1.bf16.xpose.msra.mxu0 0
        %348 = vmatprep.mubr.bf16.mxu0 0
        %349 = vmatmul.mubr.bf16.gmra.mrb[0].mxu0 %v311
        %v350 = vpop.f32.mrb[0].mxu0
        %v351 = vadd.f32 0.0, %v350
        %v352 = vpop.f32.mrb[0].mxu0
        %v353 = vpop.f32.mrb[0].mxu0
        %v354 = vpop.f32.mrb[0].mxu0
        %355 = vdwg.mxu0
        %vm356 = vcmask 64512
        %v357 = vsel %vm356, %v351, -inf
        %358 = vmax.xlane.f32.xlu0 %v357
        %v359 = vpop.xlane.xlu0 %358
        %v360 = vsub.f32 %v351, %v359
        %v361 = vmul.f32 %v360, 1.442695
        %v362 = vpow.pop %v361
        %v363 = vsel %vm356, %v362, 0.0
        %364 = vadd.xlane.f32.xlu0 %v363
        %v365 = vpop.xlane.xlu0 %364
        %v366 = vrcp.pop %v365
        %v367 = vmul.f32 %v362, %v366
        %v368 = vpack.c.bf16 %v367, %v367
        %369 = vrot.lane.b32.xlu0 %v305, 120
        %v370 = vpop.permute.xlu0 %369
        %v372 = vsel %vm356, %v368, 0
        %vm374 = vcmask 1043456
        %v376 = vsel %vm374, %v370, 0
        %378 = vmatprep.subr.bf16.mxu0 0
        %379 = vmatpush1.bf16.msra.mxu0 %v376
        %380 = vmatprep.subr.bf16.mxu0 0
        %381 = vmatpush1.bf16.msra.mxu0 0
        %382 = vmatprep.subr.bf16.mxu0 0
        %383 = vmatpush1.bf16.msra.mxu0 0
        %384 = vmatprep.subr.bf16.mxu0 0
        %385 = vmatpush1.bf16.msra.mxu0 0
        %386 = vmatprep.subr.bf16.mxu0 0
        %387 = vmatpush1.bf16.msra.mxu0 0
        %388 = vmatprep.subr.bf16.mxu0 0
        %389 = vmatpush1.bf16.msra.mxu0 0
        %390 = vmatprep.subr.bf16.mxu0 0
        %391 = vmatpush1.bf16.msra.mxu0 0
        %392 = vmatprep.subr.bf16.mxu0 0
        %393 = vmatpush1.bf16.msra.mxu0 0
        %394 = vmatprep.subr.bf16.mxu0 0
        %395 = vmatpush1.bf16.msra.mxu0 0
        %396 = vmatprep.subr.bf16.mxu0 0
        %397 = vmatpush1.bf16.msra.mxu0 0
        %398 = vmatprep.subr.bf16.mxu0 0
        %399 = vmatpush1.bf16.msra.mxu0 0
        %400 = vmatprep.subr.bf16.mxu0 0
        %401 = vmatpush1.bf16.msra.mxu0 0
        %402 = vmatprep.subr.bf16.mxu0 0
        %403 = vmatpush1.bf16.msra.mxu0 0
        %404 = vmatprep.subr.bf16.mxu0 0
        %405 = vmatpush1.bf16.msra.mxu0 0
        %406 = vmatprep.subr.bf16.mxu0 0
        %407 = vmatpush1.bf16.msra.mxu0 0
        %408 = vmatprep.subr.bf16.mxu0 0
        %409 = vmatpush1.bf16.msra.mxu0 0
        %410 = vmatprep.mubr.bf16.mxu0 0
        %411 = vmatmul.mubr.bf16.gmra.mrb[0].mxu0 %v372
        %v412 = vpop.f32.mrb[0].mxu0
        %v413 = vadd.f32 0.0, %v412
        %v414 = vpop.f32.mrb[0].mxu0
        %v415 = vpop.f32.mrb[0].mxu0
        %v416 = vpop.f32.mrb[0].mxu0
        %417 = vdwg.mxu0
        %v418 = vpack.c.bf16 %v413, %v413
        %v419 = vld [vmem:[#allocation7] sm:$0x3]
        %420 = vrot.lane.b32.xlu0 %v305, 116
        %v421 = vpop.permute.xlu0 %420
        %422 = vrot.lane.b32.xlu0 %v305, 112
        %v423 = vpop.permute.xlu0 %422
        %v425 = vsel %vm309, %v421, 0
        %v428 = vsel %vm309, %v423, 0
        %430 = vmatprep.subr.bf16.mxu0 0
        %431 = vmatpush1.bf16.xpose.msra.mxu0 %v428
        %432 = vmatprep.subr.bf16.mxu0 0
        %433 = vmatpush1.bf16.xpose.msra.mxu0 0
        %434 = vmatprep.subr.bf16.mxu0 0
        %435 = vmatpush1.bf16.xpose.msra.mxu0 0
        %436 = vmatprep.subr.bf16.mxu0 0
        %437 = vmatpush1.bf16.xpose.msra.mxu0 0
        %438 = vmatprep.subr.bf16.mxu0 0
        %439 = vmatpush1.bf16.xpose.msra.mxu0 0
        %440 = vmatprep.subr.bf16.mxu0 0
        %441 = vmatpush1.bf16.xpose.msra.mxu0 0
        %442 = vmatprep.subr.bf16.mxu0 0
        %443 = vmatpush1.bf16.xpose.msra.mxu0 0
        %444 = vmatprep.subr.bf16.mxu0 0
        %445 = vmatpush1.bf16.xpose.msra.mxu0 0
        %446 = vmatprep.subr.bf16.mxu0 0
        %447 = vmatpush1.bf16.xpose.msra.mxu0 0
        %448 = vmatprep.subr.bf16.mxu0 0
        %449 = vmatpush1.bf16.xpose.msra.mxu0 0
        %450 = vmatprep.subr.bf16.mxu0 0
        %451 = vmatpush1.bf16.xpose.msra.mxu0 0
        %452 = vmatprep.subr.bf16.mxu0 0
        %453 = vmatpush1.bf16.xpose.msra.mxu0 0
        %454 = vmatprep.subr.bf16.mxu0 0
        %455 = vmatpush1.bf16.xpose.msra.mxu0 0
        %456 = vmatprep.subr.bf16.mxu0 0
        %457 = vmatpush1.bf16.xpose.msra.mxu0 0
        %458 = vmatprep.subr.bf16.mxu0 0
        %459 = vmatpush1.bf16.xpose.msra.mxu0 0
        %460 = vmatprep.subr.bf16.mxu0 0
        %461 = vmatpush1.bf16.xpose.msra.mxu0 0
        %462 = vmatprep.mubr.bf16.mxu0 0
        %463 = vmatmul.mubr.bf16.gmra.mrb[0].mxu0 %v425
        %v464 = vpop.f32.mrb[0].mxu0
        %v465 = vadd.f32 0.0, %v464
        %v466 = vpop.f32.mrb[0].mxu0
        %v467 = vpop.f32.mrb[0].mxu0
        %v468 = vpop.f32.mrb[0].mxu0
        %469 = vdwg.mxu0
        %v470 = vsel %vm356, %v465, -inf
        %471 = vmax.xlane.f32.xlu0 %v470
        %v472 = vpop.xlane.xlu0 %471
        %v473 = vsub.f32 %v465, %v472
        %v474 = vmul.f32 %v473, 1.442695
        %v475 = vpow.pop %v474
        %v476 = vsel %vm356, %v475, 0.0
        %477 = vadd.xlane.f32.xlu0 %v476
        %v478 = vpop.xlane.xlu0 %477
        %v479 = vrcp.pop %v478
        %v480 = vmul.f32 %v475, %v479
        %v481 = vpack.c.bf16 %v480, %v480
        %482 = vrot.lane.b32.xlu0 %v305, 108
        %v483 = vpop.permute.xlu0 %482
        %v485 = vsel %vm356, %v481, 0
        %v488 = vsel %vm374, %v483, 0
        %490 = vmatprep.subr.bf16.mxu0 0
        %491 = vmatpush1.bf16.msra.mxu0 %v488
        %492 = vmatprep.subr.bf16.mxu0 0
        %493 = vmatpush1.bf16.msra.mxu0 0
        %494 = vmatprep.subr.bf16.mxu0 0
        %495 = vmatpush1.bf16.msra.mxu0 0
        %496 = vmatprep.subr.bf16.mxu0 0
        %497 = vmatpush1.bf16.msra.mxu0 0
        %498 = vmatprep.subr.bf16.mxu0 0
        %499 = vmatpush1.bf16.msra.mxu0 0
        %500 = vmatprep.subr.bf16.mxu0 0
        %501 = vmatpush1.bf16.msra.mxu0 0
        %502 = vmatprep.subr.bf16.mxu0 0
        %503 = vmatpush1.bf16.msra.mxu0 0
        %504 = vmatprep.subr.bf16.mxu0 0
        %505 = vmatpush1.bf16.msra.mxu0 0
        %506 = vmatprep.subr.bf16.mxu0 0
        %507 = vmatpush1.bf16.msra.mxu0 0
        %508 = vmatprep.subr.bf16.mxu0 0
        %509 = vmatpush1.bf16.msra.mxu0 0
        %510 = vmatprep.subr.bf16.mxu0 0
        %511 = vmatpush1.bf16.msra.mxu0 0
        %512 = vmatprep.subr.bf16.mxu0 0
        %513 = vmatpush1.bf16.msra.mxu0 0
        %514 = vmatprep.subr.bf16.mxu0 0
        %515 = vmatpush1.bf16.msra.mxu0 0
        %516 = vmatprep.subr.bf16.mxu0 0
        %517 = vmatpush1.bf16.msra.mxu0 0
        %518 = vmatprep.subr.bf16.mxu0 0
        %519 = vmatpush1.bf16.msra.mxu0 0
        %520 = vmatprep.subr.bf16.mxu0 0
        %521 = vmatpush1.bf16.msra.mxu0 0
        %522 = vmatprep.mubr.bf16.mxu0 0
        %523 = vmatmul.mubr.bf16.gmra.mrb[0].mxu0 %v485
        %v524 = vpop.f32.mrb[0].mxu0
        %v525 = vadd.f32 0.0, %v524
        %v526 = vpop.f32.mrb[0].mxu0
        %v527 = vpop.f32.mrb[0].mxu0
        %v528 = vpop.f32.mrb[0].mxu0
        %529 = vdwg.mxu0
        %v530 = vpack.c.bf16 %v525, %v525
        %v531 = vld [vmem:[#allocation7] sm:$0xc]
        %v533 = vunpack.c.l.b16 %v531
        %v534 = vpack.c.b16 %v533, %v533
        %v535 = vrot.slane %v534, 2
        %v537 = vsel %vm309, %v530, 0
        %vm539 = vcmask 1041408
        %v541 = vsel %vm539, %v535, 0
        %543 = vmatprep.subr.bf16.mxu0 0
        %544 = vmatpush1.bf16.msra.mxu0 %v541
        %545 = vmatprep.subr.bf16.mxu0 0
        %546 = vmatpush1.bf16.msra.mxu0 0
        %547 = vmatprep.subr.bf16.mxu0 0
        %548 = vmatpush1.bf16.msra.mxu0 0
        %549 = vmatprep.subr.bf16.mxu0 0
        %550 = vmatpush1.bf16.msra.mxu0 0
        %551 = vmatprep.subr.bf16.mxu0 0
        %552 = vmatpush1.bf16.msra.mxu0 0
        %553 = vmatprep.subr.bf16.mxu0 0
        %554 = vmatpush1.bf16.msra.mxu0 0
        %555 = vmatprep.subr.bf16.mxu0 0
        %556 = vmatpush1.bf16.msra.mxu0 0
        %557 = vmatprep.subr.bf16.mxu0 0
        %558 = vmatpush1.bf16.msra.mxu0 0
        %559 = vmatprep.subr.bf16.mxu0 0
        %560 = vmatpush1.bf16.msra.mxu0 0
        %561 = vmatprep.subr.bf16.mxu0 0
        %562 = vmatpush1.bf16.msra.mxu0 0
        %563 = vmatprep.subr.bf16.mxu0 0
        %564 = vmatpush1.bf16.msra.mxu0 0
        %565 = vmatprep.subr.bf16.mxu0 0
        %566 = vmatpush1.bf16.msra.mxu0 0
        %567 = vmatprep.subr.bf16.mxu0 0
        %568 = vmatpush1.bf16.msra.mxu0 0
        %569 = vmatprep.subr.bf16.mxu0 0
        %570 = vmatpush1.bf16.msra.mxu0 0
        %571 = vmatprep.subr.bf16.mxu0 0
        %572 = vmatpush1.bf16.msra.mxu0 0
        %573 = vmatprep.subr.bf16.mxu0 0
        %574 = vmatpush1.bf16.msra.mxu0 0
        %575 = vmatprep.mubr.bf16.mxu0 0
        %576 = vmatmul.mubr.bf16.gmra.mrb[0].mxu0 %v537
        %v577 = vpop.f32.mrb[0].mxu0
        %v578 = vadd.f32 0.0, %v577
        %v579 = vpop.f32.mrb[0].mxu0
        %v580 = vpop.f32.mrb[0].mxu0
        %v581 = vpop.f32.mrb[0].mxu0
        %582 = vdwg.mxu0
        %v584 = vsel %vm309, %v418, 0
        %v587 = vsel %vm539, %v419, 0
        %589 = vmatprep.subr.bf16.mxu0 0
        %590 = vmatpush1.bf16.msra.mxu0 %v587
        %591 = vmatprep.subr.bf16.mxu0 0
        %592 = vmatpush1.bf16.msra.mxu0 0
        %593 = vmatprep.subr.bf16.mxu0 0
        %594 = vmatpush1.bf16.msra.mxu0 0
        %595 = vmatprep.subr.bf16.mxu0 0
        %596 = vmatpush1.bf16.msra.mxu0 0
        %597 = vmatprep.subr.bf16.mxu0 0
        %598 = vmatpush1.bf16.msra.mxu0 0
        %599 = vmatprep.subr.bf16.mxu0 0
        %600 = vmatpush1.bf16.msra.mxu0 0
        %601 = vmatprep.subr.bf16.mxu0 0
        %602 = vmatpush1.bf16.msra.mxu0 0
        %603 = vmatprep.subr.bf16.mxu0 0
        %604 = vmatpush1.bf16.msra.mxu0 0
        %605 = vmatprep.subr.bf16.mxu0 0
        %606 = vmatpush1.bf16.msra.mxu0 0
        %607 = vmatprep.subr.bf16.mxu0 0
        %608 = vmatpush1.bf16.msra.mxu0 0
        %609 = vmatprep.subr.bf16.mxu0 0
        %610 = vmatpush1.bf16.msra.mxu0 0
        %611 = vmatprep.subr.bf16.mxu0 0
        %612 = vmatpush1.bf16.msra.mxu0 0
        %613 = vmatprep.subr.bf16.mxu0 0
        %614 = vmatpush1.bf16.msra.mxu0 0
        %615 = vmatprep.subr.bf16.mxu0 0
        %616 = vmatpush1.bf16.msra.mxu0 0
        %617 = vmatprep.subr.bf16.mxu0 0
        %618 = vmatpush1.bf16.msra.mxu0 0
        %619 = vmatprep.subr.bf16.mxu0 0
        %620 = vmatpush1.bf16.msra.mxu0 0
        %621 = vmatprep.mubr.bf16.mxu0 0
        %622 = vmatmul.mubr.bf16.gmra.mrb[0].mxu0 %v584
        %v623 = vpop.f32.mrb[0].mxu0
        %v624 = vadd.f32 %v578, %v623
        %v625 = vpop.f32.mrb[0].mxu0
        %v626 = vpop.f32.mrb[0].mxu0
        %v627 = vpop.f32.mrb[0].mxu0
        %628 = vdwg.mxu0
        %629 = vrot.lane.b32.xlu0 %v305, 104
        %v630 = vpop.permute.xlu0 %629
        %631 = vrot.lane.b32.xlu0 %v305, 100
        %v632 = vpop.permute.xlu0 %631
        %v634 = vsel %vm309, %v630, 0
        %v637 = vsel %vm309, %v632, 0
        %639 = vmatprep.subr.bf16.mxu0 0
        %640 = vmatpush1.bf16.xpose.msra.mxu0 %v637
        %641 = vmatprep.subr.bf16.mxu0 0
        %642 = vmatpush1.bf16.xpose.msra.mxu0 0
        %643 = vmatprep.subr.bf16.mxu0 0
        %644 = vmatpush1.bf16.xpose.msra.mxu0 0
        %645 = vmatprep.subr.bf16.mxu0 0
        %646 = vmatpush1.bf16.xpose.msra.mxu0 0
        %647 = vmatprep.subr.bf16.mxu0 0
        %648 = vmatpush1.bf16.xpose.msra.mxu0 0
        %649 = vmatprep.subr.bf16.mxu0 0
        %650 = vmatpush1.bf16.xpose.msra.mxu0 0
        %651 = vmatprep.subr.bf16.mxu0 0
        %652 = vmatpush1.bf16.xpose.msra.mxu0 0
        %653 = vmatprep.subr.bf16.mxu0 0
        %654 = vmatpush1.bf16.xpose.msra.mxu0 0
        %655 = vmatprep.subr.bf16.mxu0 0
        %656 = vmatpush1.bf16.xpose.msra.mxu0 0
        %657 = vmatprep.subr.bf16.mxu0 0
        %658 = vmatpush1.bf16.xpose.msra.mxu0 0
        %659 = vmatprep.subr.bf16.mxu0 0
        %660 = vmatpush1.bf16.xpose.msra.mxu0 0
        %661 = vmatprep.subr.bf16.mxu0 0
        %662 = vmatpush1.bf16.xpose.msra.mxu0 0
        %663 = vmatprep.subr.bf16.mxu0 0
        %664 = vmatpush1.bf16.xpose.msra.mxu0 0
        %665 = vmatprep.subr.bf16.mxu0 0
        %666 = vmatpush1.bf16.xpose.msra.mxu0 0
        %667 = vmatprep.subr.bf16.mxu0 0
        %668 = vmatpush1.bf16.xpose.msra.mxu0 0
        %669 = vmatprep.subr.bf16.mxu0 0
        %670 = vmatpush1.bf16.xpose.msra.mxu0 0
        %671 = vmatprep.mubr.bf16.mxu0 0
        %672 = vmatmul.mubr.bf16.gmra.mrb[0].mxu0 %v634
        %v673 = vpop.f32.mrb[0].mxu0
        %v674 = vadd.f32 0.0, %v673
        %v675 = vpop.f32.mrb[0].mxu0
        %v676 = vpop.f32.mrb[0].mxu0
        %v677 = vpop.f32.mrb[0].mxu0
        %678 = vdwg.mxu0
        %v679 = vsel %vm356, %v674, -inf
        %680 = vmax.xlane.f32.xlu0 %v679
        %v681 = vpop.xlane.xlu0 %680
        %v682 = vsub.f32 %v674, %v681
        %v683 = vmul.f32 %v682, 1.442695
        %v684 = vpow.pop %v683
        %v685 = vsel %vm356, %v684, 0.0
        %686 = vadd.xlane.f32.xlu0 %v685
        %v687 = vpop.xlane.xlu0 %686
        %v688 = vrcp.pop %v687
        %v689 = vmul.f32 %v684, %v688
        %v690 = vpack.c.bf16 %v689, %v689
        %691 = vrot.lane.b32.xlu0 %v305, 96
        %v692 = vpop.permute.xlu0 %691
        %v694 = vsel %vm356, %v690, 0
        %v697 = vsel %vm374, %v692, 0
        %699 = vmatprep.subr.bf16.mxu0 0
        %700 = vmatpush1.bf16.msra.mxu0 %v697
        %701 = vmatprep.subr.bf16.mxu0 0
        %702 = vmatpush1.bf16.msra.mxu0 0
        %703 = vmatprep.subr.bf16.mxu0 0
        %704 = vmatpush1.bf16.msra.mxu0 0
        %705 = vmatprep.subr.bf16.mxu0 0
        %706 = vmatpush1.bf16.msra.mxu0 0
        %707 = vmatprep.subr.bf16.mxu0 0
        %708 = vmatpush1.bf16.msra.mxu0 0
        %709 = vmatprep.subr.bf16.mxu0 0
        %710 = vmatpush1.bf16.msra.mxu0 0
        %711 = vmatprep.subr.bf16.mxu0 0
        %712 = vmatpush1.bf16.msra.mxu0 0
        %713 = vmatprep.subr.bf16.mxu0 0
        %714 = vmatpush1.bf16.msra.mxu0 0
        %715 = vmatprep.subr.bf16.mxu0 0
        %716 = vmatpush1.bf16.msra.mxu0 0
        %717 = vmatprep.subr.bf16.mxu0 0
        %718 = vmatpush1.bf16.msra.mxu0 0
        %719 = vmatprep.subr.bf16.mxu0 0
        %720 = vmatpush1.bf16.msra.mxu0 0
        %721 = vmatprep.subr.bf16.mxu0 0
        %722 = vmatpush1.bf16.msra.mxu0 0
        %723 = vmatprep.subr.bf16.mxu0 0
        %724 = vmatpush1.bf16.msra.mxu0 0
        %725 = vmatprep.subr.bf16.mxu0 0
        %726 = vmatpush1.bf16.msra.mxu0 0
        %727 = vmatprep.subr.bf16.mxu0 0
        %728 = vmatpush1.bf16.msra.mxu0 0
        %729 = vmatprep.subr.bf16.mxu0 0
        %730 = vmatpush1.bf16.msra.mxu0 0
        %731 = vmatprep.mubr.bf16.mxu0 0
        %732 = vmatmul.mubr.bf16.gmra.mrb[0].mxu0 %v694
        %v733 = vpop.f32.mrb[0].mxu0
        %v734 = vadd.f32 0.0, %v733
        %v735 = vpop.f32.mrb[0].mxu0
        %v736 = vpop.f32.mrb[0].mxu0
        %v737 = vpop.f32.mrb[0].mxu0
        %738 = vdwg.mxu0
        %v739 = vpack.c.bf16 %v734, %v734
        %v740 = vld [vmem:[#allocation7 + $0x4] sm:$0x3]
        %v742 = vsel %vm309, %v739, 0
        %v745 = vsel %vm539, %v740, 0
        %747 = vmatprep.subr.bf16.mxu0 0
        %748 = vmatpush1.bf16.msra.mxu0 %v745
        %749 = vmatprep.subr.bf16.mxu0 0
        %750 = vmatpush1.bf16.msra.mxu0 0
        %751 = vmatprep.subr.bf16.mxu0 0
        %752 = vmatpush1.bf16.msra.mxu0 0
        %753 = vmatprep.subr.bf16.mxu0 0
        %754 = vmatpush1.bf16.msra.mxu0 0
        %755 = vmatprep.subr.bf16.mxu0 0
        %756 = vmatpush1.bf16.msra.mxu0 0
        %757 = vmatprep.subr.bf16.mxu0 0
        %758 = vmatpush1.bf16.msra.mxu0 0
        %759 = vmatprep.subr.bf16.mxu0 0
        %760 = vmatpush1.bf16.msra.mxu0 0
        %761 = vmatprep.subr.bf16.mxu0 0
        %762 = vmatpush1.bf16.msra.mxu0 0
        %763 = vmatprep.subr.bf16.mxu0 0
        %764 = vmatpush1.bf16.msra.mxu0 0
        %765 = vmatprep.subr.bf16.mxu0 0
        %766 = vmatpush1.bf16.msra.mxu0 0
        %767 = vmatprep.subr.bf16.mxu0 0
        %768 = vmatpush1.bf16.msra.mxu0 0
        %769 = vmatprep.subr.bf16.mxu0 0
        %770 = vmatpush1.bf16.msra.mxu0 0
        %771 = vmatprep.subr.bf16.mxu0 0
        %772 = vmatpush1.bf16.msra.mxu0 0
        %773 = vmatprep.subr.bf16.mxu0 0
        %774 = vmatpush1.bf16.msra.mxu0 0
        %775 = vmatprep.subr.bf16.mxu0 0
        %776 = vmatpush1.bf16.msra.mxu0 0
        %777 = vmatprep.subr.bf16.mxu0 0
        %778 = vmatpush1.bf16.msra.mxu0 0
        %779 = vmatprep.mubr.bf16.mxu0 0
        %780 = vmatmul.mubr.bf16.gmra.mrb[0].mxu0 %v742
        %v781 = vpop.f32.mrb[0].mxu0
        %v782 = vadd.f32 0.0, %v781
        %v783 = vpop.f32.mrb[0].mxu0
        %v784 = vpop.f32.mrb[0].mxu0
        %v785 = vpop.f32.mrb[0].mxu0
        %786 = vdwg.mxu0
        %v787 = vadd.f32 %v624, %v782
        %788 = vrot.lane.b32.xlu0 %v305, 92
        %v789 = vpop.permute.xlu0 %788
        %790 = vrot.lane.b32.xlu0 %v305, 88
        %v791 = vpop.permute.xlu0 %790
        %v793 = vsel %vm309, %v789, 0
        %v796 = vsel %vm309, %v791, 0
        %798 = vmatprep.subr.bf16.mxu0 0
        %799 = vmatpush1.bf16.xpose.msra.mxu0 %v796
        %800 = vmatprep.subr.bf16.mxu0 0
        %801 = vmatpush1.bf16.xpose.msra.mxu0 0
        %802 = vmatprep.subr.bf16.mxu0 0
        %803 = vmatpush1.bf16.xpose.msra.mxu0 0
        %804 = vmatprep.subr.bf16.mxu0 0
        %805 = vmatpush1.bf16.xpose.msra.mxu0 0
        %806 = vmatprep.subr.bf16.mxu0 0
        %807 = vmatpush1.bf16.xpose.msra.mxu0 0
        %808 = vmatprep.subr.bf16.mxu0 0
        %809 = vmatpush1.bf16.xpose.msra.mxu0 0
        %810 = vmatprep.subr.bf16.mxu0 0
        %811 = vmatpush1.bf16.xpose.msra.mxu0 0
        %812 = vmatprep.subr.bf16.mxu0 0
        %813 = vmatpush1.bf16.xpose.msra.mxu0 0
        %814 = vmatprep.subr.bf16.mxu0 0
        %815 = vmatpush1.bf16.xpose.msra.mxu0 0
        %816 = vmatprep.subr.bf16.mxu0 0
        %817 = vmatpush1.bf16.xpose.msra.mxu0 0
        %818 = vmatprep.subr.bf16.mxu0 0
        %819 = vmatpush1.bf16.xpose.msra.mxu0 0
        %820 = vmatprep.subr.bf16.mxu0 0
        %821 = vmatpush1.bf16.xpose.msra.mxu0 0
        %822 = vmatprep.subr.bf16.mxu0 0
        %823 = vmatpush1.bf16.xpose.msra.mxu0 0
        %824 = vmatprep.subr.bf16.mxu0 0
        %825 = vmatpush1.bf16.xpose.msra.mxu0 0
        %826 = vmatprep.subr.bf16.mxu0 0
        %827 = vmatpush1.bf16.xpose.msra.mxu0 0
        %828 = vmatprep.subr.bf16.mxu0 0
        %829 = vmatpush1.bf16.xpose.msra.mxu0 0
        %830 = vmatprep.mubr.bf16.mxu0 0
        %831 = vmatmul.mubr.bf16.gmra.mrb[0].mxu0 %v793
        %v832 = vpop.f32.mrb[0].mxu0
        %v833 = vadd.f32 0.0, %v832
        %v834 = vpop.f32.mrb[0].mxu0
        %v835 = vpop.f32.mrb[0].mxu0
        %v836 = vpop.f32.mrb[0].mxu0
        %837 = vdwg.mxu0
        %v838 = vsel %vm356, %v833, -inf
        %839 = vmax.xlane.f32.xlu0 %v838
        %v840 = vpop.xlane.xlu0 %839
        %v841 = vsub.f32 %v833, %v840
        %v842 = vmul.f32 %v841, 1.442695
        %v843 = vpow.pop %v842
        %v844 = vsel %vm356, %v843, 0.0
        %845 = vadd.xlane.f32.xlu0 %v844
        %v846 = vpop.xlane.xlu0 %845
        %v847 = vrcp.pop %v846
        %v848 = vmul.f32 %v843, %v847
        %v849 = vpack.c.bf16 %v848, %v848
        %850 = vrot.lane.b32.xlu0 %v305, 84
        %v851 = vpop.permute.xlu0 %850
        %v853 = vsel %vm356, %v849, 0
        %v856 = vsel %vm374, %v851, 0
        %858 = vmatprep.subr.bf16.mxu0 0
        %859 = vmatpush1.bf16.msra.mxu0 %v856
        %860 = vmatprep.subr.bf16.mxu0 0
        %861 = vmatpush1.bf16.msra.mxu0 0
        %862 = vmatprep.subr.bf16.mxu0 0
        %863 = vmatpush1.bf16.msra.mxu0 0
        %864 = vmatprep.subr.bf16.mxu0 0
        %865 = vmatpush1.bf16.msra.mxu0 0
        %866 = vmatprep.subr.bf16.mxu0 0
        %867 = vmatpush1.bf16.msra.mxu0 0
        %868 = vmatprep.subr.bf16.mxu0 0
        %869 = vmatpush1.bf16.msra.mxu0 0
        %870 = vmatprep.subr.bf16.mxu0 0
        %871 = vmatpush1.bf16.msra.mxu0 0
        %872 = vmatprep.subr.bf16.mxu0 0
        %873 = vmatpush1.bf16.msra.mxu0 0
        %874 = vmatprep.subr.bf16.mxu0 0
        %875 = vmatpush1.bf16.msra.mxu0 0
        %876 = vmatprep.subr.bf16.mxu0 0
        %877 = vmatpush1.bf16.msra.mxu0 0
        %878 = vmatprep.subr.bf16.mxu0 0
        %879 = vmatpush1.bf16.msra.mxu0 0
        %880 = vmatprep.subr.bf16.mxu0 0
        %881 = vmatpush1.bf16.msra.mxu0 0
        %882 = vmatprep.subr.bf16.mxu0 0
        %883 = vmatpush1.bf16.msra.mxu0 0
        %884 = vmatprep.subr.bf16.mxu0 0
        %885 = vmatpush1.bf16.msra.mxu0 0
        %886 = vmatprep.subr.bf16.mxu0 0
        %887 = vmatpush1.bf16.msra.mxu0 0
        %888 = vmatprep.subr.bf16.mxu0 0
        %889 = vmatpush1.bf16.msra.mxu0 0
        %890 = vmatprep.mubr.bf16.mxu0 0
        %891 = vmatmul.mubr.bf16.gmra.mrb[0].mxu0 %v853
        %v892 = vpop.f32.mrb[0].mxu0
        %v893 = vadd.f32 0.0, %v892
        %v894 = vpop.f32.mrb[0].mxu0
        %v895 = vpop.f32.mrb[0].mxu0
        %v896 = vpop.f32.mrb[0].mxu0
        %897 = vdwg.mxu0
        %v898 = vpack.c.bf16 %v893, %v893
        %v899 = vld [vmem:[#allocation7 + $0x4] sm:$0xc]
        %v901 = vunpack.c.l.b16 %v899
        %v902 = vpack.c.b16 %v901, %v901
        %v903 = vrot.slane %v902, 2
        %v905 = vsel %vm309, %v898, 0
        %v908 = vsel %vm539, %v903, 0
        %910 = vmatprep.subr.bf16.mxu0 0
        %911 = vmatpush1.bf16.msra.mxu0 %v908
        %912 = vmatprep.subr.bf16.mxu0 0
        %913 = vmatpush1.bf16.msra.mxu0 0
        %914 = vmatprep.subr.bf16.mxu0 0
        %915 = vmatpush1.bf16.msra.mxu0 0
        %916 = vmatprep.subr.bf16.mxu0 0
        %917 = vmatpush1.bf16.msra.mxu0 0
        %918 = vmatprep.subr.bf16.mxu0 0
        %919 = vmatpush1.bf16.msra.mxu0 0
        %920 = vmatprep.subr.bf16.mxu0 0
        %921 = vmatpush1.bf16.msra.mxu0 0
        %922 = vmatprep.subr.bf16.mxu0 0
        %923 = vmatpush1.bf16.msra.mxu0 0
        %924 = vmatprep.subr.bf16.mxu0 0
        %925 = vmatpush1.bf16.msra.mxu0 0
        %926 = vmatprep.subr.bf16.mxu0 0
        %927 = vmatpush1.bf16.msra.mxu0 0
        %928 = vmatprep.subr.bf16.mxu0 0
        %929 = vmatpush1.bf16.msra.mxu0 0
        %930 = vmatprep.subr.bf16.mxu0 0
        %931 = vmatpush1.bf16.msra.mxu0 0
        %932 = vmatprep.subr.bf16.mxu0 0
        %933 = vmatpush1.bf16.msra.mxu0 0
        %934 = vmatprep.subr.bf16.mxu0 0
        %935 = vmatpush1.bf16.msra.mxu0 0
        %936 = vmatprep.subr.bf16.mxu0 0
        %937 = vmatpush1.bf16.msra.mxu0 0
        %938 = vmatprep.subr.bf16.mxu0 0
        %939 = vmatpush1.bf16.msra.mxu0 0
        %940 = vmatprep.subr.bf16.mxu0 0
        %941 = vmatpush1.bf16.msra.mxu0 0
        %942 = vmatprep.mubr.bf16.mxu0 0
        %943 = vmatmul.mubr.bf16.gmra.mrb[0].mxu0 %v905
        %v944 = vpop.f32.mrb[0].mxu0
        %v945 = vadd.f32 0.0, %v944
        %v946 = vpop.f32.mrb[0].mxu0
        %v947 = vpop.f32.mrb[0].mxu0
        %v948 = vpop.f32.mrb[0].mxu0
        %949 = vdwg.mxu0
        %v950 = vadd.f32 %v787, %v945
        %951 = vrot.lane.b32.xlu0 %v305, 80
        %v952 = vpop.permute.xlu0 %951
        %953 = vrot.lane.b32.xlu0 %v305, 76
        %v954 = vpop.permute.xlu0 %953
        %v956 = vsel %vm309, %v952, 0
        %v959 = vsel %vm309, %v954, 0
        %961 = vmatprep.subr.bf16.mxu0 0
        %962 = vmatpush1.bf16.xpose.msra.mxu0 %v959
        %963 = vmatprep.subr.bf16.mxu0 0
        %964 = vmatpush1.bf16.xpose.msra.mxu0 0
        %965 = vmatprep.subr.bf16.mxu0 0
        %966 = vmatpush1.bf16.xpose.msra.mxu0 0
        %967 = vmatprep.subr.bf16.mxu0 0
        %968 = vmatpush1.bf16.xpose.msra.mxu0 0
        %969 = vmatprep.subr.bf16.mxu0 0
        %970 = vmatpush1.bf16.xpose.msra.mxu0 0
        %971 = vmatprep.subr.bf16.mxu0 0
        %972 = vmatpush1.bf16.xpose.msra.mxu0 0
        %973 = vmatprep.subr.bf16.mxu0 0
        %974 = vmatpush1.bf16.xpose.msra.mxu0 0
        %975 = vmatprep.subr.bf16.mxu0 0
        %976 = vmatpush1.bf16.xpose.msra.mxu0 0
        %977 = vmatprep.subr.bf16.mxu0 0
        %978 = vmatpush1.bf16.xpose.msra.mxu0 0
        %979 = vmatprep.subr.bf16.mxu0 0
        %980 = vmatpush1.bf16.xpose.msra.mxu0 0
        %981 = vmatprep.subr.bf16.mxu0 0
        %982 = vmatpush1.bf16.xpose.msra.mxu0 0
        %983 = vmatprep.subr.bf16.mxu0 0
        %984 = vmatpush1.bf16.xpose.msra.mxu0 0
        %985 = vmatprep.subr.bf16.mxu0 0
        %986 = vmatpush1.bf16.xpose.msra.mxu0 0
        %987 = vmatprep.subr.bf16.mxu0 0
        %988 = vmatpush1.bf16.xpose.msra.mxu0 0
        %989 = vmatprep.subr.bf16.mxu0 0
        %990 = vmatpush1.bf16.xpose.msra.mxu0 0
        %991 = vmatprep.subr.bf16.mxu0 0
        %992 = vmatpush1.bf16.xpose.msra.mxu0 0
        %993 = vmatprep.mubr.bf16.mxu0 0
        %994 = vmatmul.mubr.bf16.gmra.mrb[0].mxu0 %v956
        %v995 = vpop.f32.mrb[0].mxu0
        %v996 = vadd.f32 0.0, %v995
        %v997 = vpop.f32.mrb[0].mxu0
        %v998 = vpop.f32.mrb[0].mxu0
        %v999 = vpop.f32.mrb[0].mxu0
        %1000 = vdwg.mxu0
        %v1001 = vsel %vm356, %v996, -inf
        %1002 = vmax.xlane.f32.xlu0 %v1001
        %v1003 = vpop.xlane.xlu0 %1002
        %v1004 = vsub.f32 %v996, %v1003
        %v1005 = vmul.f32 %v1004, 1.442695
        %v1006 = vpow.pop %v1005
        %v1007 = vsel %vm356, %v1006, 0.0
        %1008 = vadd.xlane.f32.xlu0 %v1007
        %v1009 = vpop.xlane.xlu0 %1008
        %v1010 = vrcp.pop %v1009
        %v1011 = vmul.f32 %v1006, %v1010
        %v1012 = vpack.c.bf16 %v1011, %v1011
        %1013 = vrot.lane.b32.xlu0 %v305, 72
        %v1014 = vpop.permute.xlu0 %1013
        %v1016 = vsel %vm356, %v1012, 0
        %v1019 = vsel %vm374, %v1014, 0
        %1021 = vmatprep.subr.bf16.mxu0 0
        %1022 = vmatpush1.bf16.msra.mxu0 %v1019
        %1023 = vmatprep.subr.bf16.mxu0 0
        %1024 = vmatpush1.bf16.msra.mxu0 0
        %1025 = vmatprep.subr.bf16.mxu0 0
        %1026 = vmatpush1.bf16.msra.mxu0 0
        %1027 = vmatprep.subr.bf16.mxu0 0
        %1028 = vmatpush1.bf16.msra.mxu0 0
        %1029 = vmatprep.subr.bf16.mxu0 0
        %1030 = vmatpush1.bf16.msra.mxu0 0
        %1031 = vmatprep.subr.bf16.mxu0 0
        %1032 = vmatpush1.bf16.msra.mxu0 0
        %1033 = vmatprep.subr.bf16.mxu0 0
        %1034 = vmatpush1.bf16.msra.mxu0 0
        %1035 = vmatprep.subr.bf16.mxu0 0
        %1036 = vmatpush1.bf16.msra.mxu0 0
        %1037 = vmatprep.subr.bf16.mxu0 0
        %1038 = vmatpush1.bf16.msra.mxu0 0
        %1039 = vmatprep.subr.bf16.mxu0 0
        %1040 = vmatpush1.bf16.msra.mxu0 0
        %1041 = vmatprep.subr.bf16.mxu0 0
        %1042 = vmatpush1.bf16.msra.mxu0 0
        %1043 = vmatprep.subr.bf16.mxu0 0
        %1044 = vmatpush1.bf16.msra.mxu0 0
        %1045 = vmatprep.subr.bf16.mxu0 0
        %1046 = vmatpush1.bf16.msra.mxu0 0
        %1047 = vmatprep.subr.bf16.mxu0 0
        %1048 = vmatpush1.bf16.msra.mxu0 0
        %1049 = vmatprep.subr.bf16.mxu0 0
        %1050 = vmatpush1.bf16.msra.mxu0 0
        %1051 = vmatprep.subr.bf16.mxu0 0
        %1052 = vmatpush1.bf16.msra.mxu0 0
        %1053 = vmatprep.mubr.bf16.mxu0 0
        %1054 = vmatmul.mubr.bf16.gmra.mrb[0].mxu0 %v1016
        %v1055 = vpop.f32.mrb[0].mxu0
        %v1056 = vadd.f32 0.0, %v1055
        %v1057 = vpop.f32.mrb[0].mxu0
        %v1058 = vpop.f32.mrb[0].mxu0
        %v1059 = vpop.f32.mrb[0].mxu0
        %1060 = vdwg.mxu0
        %v1061 = vpack.c.bf16 %v1056, %v1056
        %v1062 = vld [vmem:[#allocation7 + $0x8] sm:$0x3]
        %v1064 = vsel %vm309, %v1061, 0
        %v1067 = vsel %vm539, %v1062, 0
        %1069 = vmatprep.subr.bf16.mxu0 0
        %1070 = vmatpush1.bf16.msra.mxu0 %v1067
        %1071 = vmatprep.subr.bf16.mxu0 0
        %1072 = vmatpush1.bf16.msra.mxu0 0
        %1073 = vmatprep.subr.bf16.mxu0 0
        %1074 = vmatpush1.bf16.msra.mxu0 0
        %1075 = vmatprep.subr.bf16.mxu0 0
        %1076 = vmatpush1.bf16.msra.mxu0 0
        %1077 = vmatprep.subr.bf16.mxu0 0
        %1078 = vmatpush1.bf16.msra.mxu0 0
        %1079 = vmatprep.subr.bf16.mxu0 0
        %1080 = vmatpush1.bf16.msra.mxu0 0
        %1081 = vmatprep.subr.bf16.mxu0 0
        %1082 = vmatpush1.bf16.msra.mxu0 0
        %1083 = vmatprep.subr.bf16.mxu0 0
        %1084 = vmatpush1.bf16.msra.mxu0 0
        %1085 = vmatprep.subr.bf16.mxu0 0
        %1086 = vmatpush1.bf16.msra.mxu0 0
        %1087 = vmatprep.subr.bf16.mxu0 0
        %1088 = vmatpush1.bf16.msra.mxu0 0
        %1089 = vmatprep.subr.bf16.mxu0 0
        %1090 = vmatpush1.bf16.msra.mxu0 0
        %1091 = vmatprep.subr.bf16.mxu0 0
        %1092 = vmatpush1.bf16.msra.mxu0 0
        %1093 = vmatprep.subr.bf16.mxu0 0
        %1094 = vmatpush1.bf16.msra.mxu0 0
        %1095 = vmatprep.subr.bf16.mxu0 0
        %1096 = vmatpush1.bf16.msra.mxu0 0
        %1097 = vmatprep.subr.bf16.mxu0 0
        %1098 = vmatpush1.bf16.msra.mxu0 0
        %1099 = vmatprep.subr.bf16.mxu0 0
        %1100 = vmatpush1.bf16.msra.mxu0 0
        %1101 = vmatprep.mubr.bf16.mxu0 0
        %1102 = vmatmul.mubr.bf16.gmra.mrb[0].mxu0 %v1064
        %v1103 = vpop.f32.mrb[0].mxu0
        %v1104 = vadd.f32 0.0, %v1103
        %v1105 = vpop.f32.mrb[0].mxu0
        %v1106 = vpop.f32.mrb[0].mxu0
        %v1107 = vpop.f32.mrb[0].mxu0
        %1108 = vdwg.mxu0
        %v1109 = vadd.f32 %v950, %v1104
        %1110 = vrot.lane.b32.xlu0 %v305, 68
        %v1111 = vpop.permute.xlu0 %1110
        %1112 = vrot.lane.b32.xlu0 %v305, 64
        %v1113 = vpop.permute.xlu0 %1112
        %v1115 = vsel %vm309, %v1111, 0
        %v1118 = vsel %vm309, %v1113, 0
        %1120 = vmatprep.subr.bf16.mxu0 0
        %1121 = vmatpush1.bf16.xpose.msra.mxu0 %v1118
        %1122 = vmatprep.subr.bf16.mxu0 0
        %1123 = vmatpush1.bf16.xpose.msra.mxu0 0
        %1124 = vmatprep.subr.bf16.mxu0 0
        %1125 = vmatpush1.bf16.xpose.msra.mxu0 0
        %1126 = vmatprep.subr.bf16.mxu0 0
        %1127 = vmatpush1.bf16.xpose.msra.mxu0 0
        %1128 = vmatprep.subr.bf16.mxu0 0
        %1129 = vmatpush1.bf16.xpose.msra.mxu0 0
        %1130 = vmatprep.subr.bf16.mxu0 0
        %1131 = vmatpush1.bf16.xpose.msra.mxu0 0
        %1132 = vmatprep.subr.bf16.mxu0 0
        %1133 = vmatpush1.bf16.xpose.msra.mxu0 0
        %1134 = vmatprep.subr.bf16.mxu0 0
        %1135 = vmatpush1.bf16.xpose.msra.mxu0 0
        %1136 = vmatprep.subr.bf16.mxu0 0
        %1137 = vmatpush1.bf16.xpose.msra.mxu0 0
        %1138 = vmatprep.subr.bf16.mxu0 0
        %1139 = vmatpush1.bf16.xpose.msra.mxu0 0
        %1140 = vmatprep.subr.bf16.mxu0 0
        %1141 = vmatpush1.bf16.xpose.msra.mxu0 0
        %1142 = vmatprep.subr.bf16.mxu0 0
        %1143 = vmatpush1.bf16.xpose.msra.mxu0 0
        %1144 = vmatprep.subr.bf16.mxu0 0
        %1145 = vmatpush1.bf16.xpose.msra.mxu0 0
        %1146 = vmatprep.subr.bf16.mxu0 0
        %1147 = vmatpush1.bf16.xpose.msra.mxu0 0
        %1148 = vmatprep.subr.bf16.mxu0 0
        %1149 = vmatpush1.bf16.xpose.msra.mxu0 0
        %1150 = vmatprep.subr.bf16.mxu0 0
        %1151 = vmatpush1.bf16.xpose.msra.mxu0 0
        %1152 = vmatprep.mubr.bf16.mxu0 0
        %1153 = vmatmul.mubr.bf16.gmra.mrb[0].mxu0 %v1115
        %v1154 = vpop.f32.mrb[0].mxu0
        %v1155 = vadd.f32 0.0, %v1154
        %v1156 = vpop.f32.mrb[0].mxu0
        %v1157 = vpop.f32.mrb[0].mxu0
        %v1158 = vpop.f32.mrb[0].mxu0
        %1159 = vdwg.mxu0
        %v1160 = vsel %vm356, %v1155, -inf
        %1161 = vmax.xlane.f32.xlu0 %v1160
        %v1162 = vpop.xlane.xlu0 %1161
        %v1163 = vsub.f32 %v1155, %v1162
        %v1164 = vmul.f32 %v1163, 1.442695
        %v1165 = vpow.pop %v1164
        %v1166 = vsel %vm356, %v1165, 0.0
        %1167 = vadd.xlane.f32.xlu0 %v1166
        %v1168 = vpop.xlane.xlu0 %1167
        %v1169 = vrcp.pop %v1168
        %v1170 = vmul.f32 %v1165, %v1169
        %v1171 = vpack.c.bf16 %v1170, %v1170
        %1172 = vrot.lane.b32.xlu0 %v305, 60
        %v1173 = vpop.permute.xlu0 %1172
        %v1175 = vsel %vm356, %v1171, 0
        %v1178 = vsel %vm374, %v1173, 0
        %1180 = vmatprep.subr.bf16.mxu0 0
        %1181 = vmatpush1.bf16.msra.mxu0 %v1178
        %1182 = vmatprep.subr.bf16.mxu0 0
        %1183 = vmatpush1.bf16.msra.mxu0 0
        %1184 = vmatprep.subr.bf16.mxu0 0
        %1185 = vmatpush1.bf16.msra.mxu0 0
        %1186 = vmatprep.subr.bf16.mxu0 0
        %1187 = vmatpush1.bf16.msra.mxu0 0
        %1188 = vmatprep.subr.bf16.mxu0 0
        %1189 = vmatpush1.bf16.msra.mxu0 0
        %1190 = vmatprep.subr.bf16.mxu0 0
        %1191 = vmatpush1.bf16.msra.mxu0 0
        %1192 = vmatprep.subr.bf16.mxu0 0
        %1193 = vmatpush1.bf16.msra.mxu0 0
        %1194 = vmatprep.subr.bf16.mxu0 0
        %1195 = vmatpush1.bf16.msra.mxu0 0
        %1196 = vmatprep.subr.bf16.mxu0 0
        %1197 = vmatpush1.bf16.msra.mxu0 0
        %1198 = vmatprep.subr.bf16.mxu0 0
        %1199 = vmatpush1.bf16.msra.mxu0 0
        %1200 = vmatprep.subr.bf16.mxu0 0
        %1201 = vmatpush1.bf16.msra.mxu0 0
        %1202 = vmatprep.subr.bf16.mxu0 0
        %1203 = vmatpush1.bf16.msra.mxu0 0
        %1204 = vmatprep.subr.bf16.mxu0 0
        %1205 = vmatpush1.bf16.msra.mxu0 0
        %1206 = vmatprep.subr.bf16.mxu0 0
        %1207 = vmatpush1.bf16.msra.mxu0 0
        %1208 = vmatprep.subr.bf16.mxu0 0
        %1209 = vmatpush1.bf16.msra.mxu0 0
        %1210 = vmatprep.subr.bf16.mxu0 0
        %1211 = vmatpush1.bf16.msra.mxu0 0
        %1212 = vmatprep.mubr.bf16.mxu0 0
        %1213 = vmatmul.mubr.bf16.gmra.mrb[0].mxu0 %v1175
        %v1214 = vpop.f32.mrb[0].mxu0
        %v1215 = vadd.f32 0.0, %v1214
        %v1216 = vpop.f32.mrb[0].mxu0
        %v1217 = vpop.f32.mrb[0].mxu0
        %v1218 = vpop.f32.mrb[0].mxu0
        %1219 = vdwg.mxu0
        %v1220 = vpack.c.bf16 %v1215, %v1215
        %v1221 = vld [vmem:[#allocation7 + $0x8] sm:$0xc]
        %v1223 = vunpack.c.l.b16 %v1221
        %v1224 = vpack.c.b16 %v1223, %v1223
        %v1225 = vrot.slane %v1224, 2
        %v1227 = vsel %vm309, %v1220, 0
        %v1230 = vsel %vm539, %v1225, 0
        %1232 = vmatprep.subr.bf16.mxu0 0
        %1233 = vmatpush1.bf16.msra.mxu0 %v1230
        %1234 = vmatprep.subr.bf16.mxu0 0
        %1235 = vmatpush1.bf16.msra.mxu0 0
        %1236 = vmatprep.subr.bf16.mxu0 0
        %1237 = vmatpush1.bf16.msra.mxu0 0
        %1238 = vmatprep.subr.bf16.mxu0 0
        %1239 = vmatpush1.bf16.msra.mxu0 0
        %1240 = vmatprep.subr.bf16.mxu0 0
        %1241 = vmatpush1.bf16.msra.mxu0 0
        %1242 = vmatprep.subr.bf16.mxu0 0
        %1243 = vmatpush1.bf16.msra.mxu0 0
        %1244 = vmatprep.subr.bf16.mxu0 0
        %1245 = vmatpush1.bf16.msra.mxu0 0
        %1246 = vmatprep.subr.bf16.mxu0 0
        %1247 = vmatpush1.bf16.msra.mxu0 0
        %1248 = vmatprep.subr.bf16.mxu0 0
        %1249 = vmatpush1.bf16.msra.mxu0 0
        %1250 = vmatprep.subr.bf16.mxu0 0
        %1251 = vmatpush1.bf16.msra.mxu0 0
        %1252 = vmatprep.subr.bf16.mxu0 0
        %1253 = vmatpush1.bf16.msra.mxu0 0
        %1254 = vmatprep.subr.bf16.mxu0 0
        %1255 = vmatpush1.bf16.msra.mxu0 0
        %1256 = vmatprep.subr.bf16.mxu0 0
        %1257 = vmatpush1.bf16.msra.mxu0 0
        %1258 = vmatprep.subr.bf16.mxu0 0
        %1259 = vmatpush1.bf16.msra.mxu0 0
        %1260 = vmatprep.subr.bf16.mxu0 0
        %1261 = vmatpush1.bf16.msra.mxu0 0
        %1262 = vmatprep.subr.bf16.mxu0 0
        %1263 = vmatpush1.bf16.msra.mxu0 0
        %1264 = vmatprep.mubr.bf16.mxu0 0
        %1265 = vmatmul.mubr.bf16.gmra.mrb[0].mxu0 %v1227
        %v1266 = vpop.f32.mrb[0].mxu0
        %v1267 = vadd.f32 0.0, %v1266
        %v1268 = vpop.f32.mrb[0].mxu0
        %v1269 = vpop.f32.mrb[0].mxu0
        %v1270 = vpop.f32.mrb[0].mxu0
        %1271 = vdwg.mxu0
        %v1272 = vadd.f32 %v1109, %v1267
        %1273 = vrot.lane.b32.xlu0 %v305, 56
        %v1274 = vpop.permute.xlu0 %1273
        %1275 = vrot.lane.b32.xlu0 %v305, 52
        %v1276 = vpop.permute.xlu0 %1275
        %v1278 = vsel %vm309, %v1274, 0
        %v1281 = vsel %vm309, %v1276, 0
        %1283 = vmatprep.subr.bf16.mxu0 0
        %1284 = vmatpush1.bf16.xpose.msra.mxu0 %v1281
        %1285 = vmatprep.subr.bf16.mxu0 0
        %1286 = vmatpush1.bf16.xpose.msra.mxu0 0
        %1287 = vmatprep.subr.bf16.mxu0 0
        %1288 = vmatpush1.bf16.xpose.msra.mxu0 0
        %1289 = vmatprep.subr.bf16.mxu0 0
        %1290 = vmatpush1.bf16.xpose.msra.mxu0 0
        %1291 = vmatprep.subr.bf16.mxu0 0
        %1292 = vmatpush1.bf16.xpose.msra.mxu0 0
        %1293 = vmatprep.subr.bf16.mxu0 0
        %1294 = vmatpush1.bf16.xpose.msra.mxu0 0
        %1295 = vmatprep.subr.bf16.mxu0 0
        %1296 = vmatpush1.bf16.xpose.msra.mxu0 0
        %1297 = vmatprep.subr.bf16.mxu0 0
        %1298 = vmatpush1.bf16.xpose.msra.mxu0 0
        %1299 = vmatprep.subr.bf16.mxu0 0
        %1300 = vmatpush1.bf16.xpose.msra.mxu0 0
        %1301 = vmatprep.subr.bf16.mxu0 0
        %1302 = vmatpush1.bf16.xpose.msra.mxu0 0
        %1303 = vmatprep.subr.bf16.mxu0 0
        %1304 = vmatpush1.bf16.xpose.msra.mxu0 0
        %1305 = vmatprep.subr.bf16.mxu0 0
        %1306 = vmatpush1.bf16.xpose.msra.mxu0 0
        %1307 = vmatprep.subr.bf16.mxu0 0
        %1308 = vmatpush1.bf16.xpose.msra.mxu0 0
        %1309 = vmatprep.subr.bf16.mxu0 0
        %1310 = vmatpush1.bf16.xpose.msra.mxu0 0
        %1311 = vmatprep.subr.bf16.mxu0 0
        %1312 = vmatpush1.bf16.xpose.msra.mxu0 0
        %1313 = vmatprep.subr.bf16.mxu0 0
        %1314 = vmatpush1.bf16.xpose.msra.mxu0 0
        %1315 = vmatprep.mubr.bf16.mxu0 0
        %1316 = vmatmul.mubr.bf16.gmra.mrb[0].mxu0 %v1278
        %v1317 = vpop.f32.mrb[0].mxu0
        %v1318 = vadd.f32 0.0, %v1317
        %v1319 = vpop.f32.mrb[0].mxu0
        %v1320 = vpop.f32.mrb[0].mxu0
        %v1321 = vpop.f32.mrb[0].mxu0
        %1322 = vdwg.mxu0
        %v1323 = vsel %vm356, %v1318, -inf
        %1324 = vmax.xlane.f32.xlu0 %v1323
        %v1325 = vpop.xlane.xlu0 %1324
        %v1326 = vsub.f32 %v1318, %v1325
        %v1327 = vmul.f32 %v1326, 1.442695
        %v1328 = vpow.pop %v1327
        %v1329 = vsel %vm356, %v1328, 0.0
        %1330 = vadd.xlane.f32.xlu0 %v1329
        %v1331 = vpop.xlane.xlu0 %1330
        %v1332 = vrcp.pop %v1331
        %v1333 = vmul.f32 %v1328, %v1332
        %v1334 = vpack.c.bf16 %v1333, %v1333
        %1335 = vrot.lane.b32.xlu0 %v305, 48
        %v1336 = vpop.permute.xlu0 %1335
        %v1338 = vsel %vm356, %v1334, 0
        %v1341 = vsel %vm374, %v1336, 0
        %1343 = vmatprep.subr.bf16.mxu0 0
        %1344 = vmatpush1.bf16.msra.mxu0 %v1341
        %1345 = vmatprep.subr.bf16.mxu0 0
        %1346 = vmatpush1.bf16.msra.mxu0 0
        %1347 = vmatprep.subr.bf16.mxu0 0
        %1348 = vmatpush1.bf16.msra.mxu0 0
        %1349 = vmatprep.subr.bf16.mxu0 0
        %1350 = vmatpush1.bf16.msra.mxu0 0
        %1351 = vmatprep.subr.bf16.mxu0 0
        %1352 = vmatpush1.bf16.msra.mxu0 0
        %1353 = vmatprep.subr.bf16.mxu0 0
        %1354 = vmatpush1.bf16.msra.mxu0 0
        %1355 = vmatprep.subr.bf16.mxu0 0
        %1356 = vmatpush1.bf16.msra.mxu0 0
        %1357 = vmatprep.subr.bf16.mxu0 0
        %1358 = vmatpush1.bf16.msra.mxu0 0
        %1359 = vmatprep.subr.bf16.mxu0 0
        %1360 = vmatpush1.bf16.msra.mxu0 0
        %1361 = vmatprep.subr.bf16.mxu0 0
        %1362 = vmatpush1.bf16.msra.mxu0 0
        %1363 = vmatprep.subr.bf16.mxu0 0
        %1364 = vmatpush1.bf16.msra.mxu0 0
        %1365 = vmatprep.subr.bf16.mxu0 0
        %1366 = vmatpush1.bf16.msra.mxu0 0
        %1367 = vmatprep.subr.bf16.mxu0 0
        %1368 = vmatpush1.bf16.msra.mxu0 0
        %1369 = vmatprep.subr.bf16.mxu0 0
        %1370 = vmatpush1.bf16.msra.mxu0 0
        %1371 = vmatprep.subr.bf16.mxu0 0
        %1372 = vmatpush1.bf16.msra.mxu0 0
        %1373 = vmatprep.subr.bf16.mxu0 0
        %1374 = vmatpush1.bf16.msra.mxu0 0
        %1375 = vmatprep.mubr.bf16.mxu0 0
        %1376 = vmatmul.mubr.bf16.gmra.mrb[0].mxu0 %v1338
        %v1377 = vpop.f32.mrb[0].mxu0
        %v1378 = vadd.f32 0.0, %v1377
        %v1379 = vpop.f32.mrb[0].mxu0
        %v1380 = vpop.f32.mrb[0].mxu0
        %v1381 = vpop.f32.mrb[0].mxu0
        %1382 = vdwg.mxu0
        %v1383 = vpack.c.bf16 %v1378, %v1378
        %v1384 = vld [vmem:[#allocation7 + $0xc] sm:$0x3]
        %v1386 = vsel %vm309, %v1383, 0
        %v1389 = vsel %vm539, %v1384, 0
        %1391 = vmatprep.subr.bf16.mxu0 0
        %1392 = vmatpush1.bf16.msra.mxu0 %v1389
        %1393 = vmatprep.subr.bf16.mxu0 0
        %1394 = vmatpush1.bf16.msra.mxu0 0
        %1395 = vmatprep.subr.bf16.mxu0 0
        %1396 = vmatpush1.bf16.msra.mxu0 0
        %1397 = vmatprep.subr.bf16.mxu0 0
        %1398 = vmatpush1.bf16.msra.mxu0 0
        %1399 = vmatprep.subr.bf16.mxu0 0
        %1400 = vmatpush1.bf16.msra.mxu0 0
        %1401 = vmatprep.subr.bf16.mxu0 0
        %1402 = vmatpush1.bf16.msra.mxu0 0
        %1403 = vmatprep.subr.bf16.mxu0 0
        %1404 = vmatpush1.bf16.msra.mxu0 0
        %1405 = vmatprep.subr.bf16.mxu0 0
        %1406 = vmatpush1.bf16.msra.mxu0 0
        %1407 = vmatprep.subr.bf16.mxu0 0
        %1408 = vmatpush1.bf16.msra.mxu0 0
        %1409 = vmatprep.subr.bf16.mxu0 0
        %1410 = vmatpush1.bf16.msra.mxu0 0
        %1411 = vmatprep.subr.bf16.mxu0 0
        %1412 = vmatpush1.bf16.msra.mxu0 0
        %1413 = vmatprep.subr.bf16.mxu0 0
        %1414 = vmatpush1.bf16.msra.mxu0 0
        %1415 = vmatprep.subr.bf16.mxu0 0
        %1416 = vmatpush1.bf16.msra.mxu0 0
        %1417 = vmatprep.subr.bf16.mxu0 0
        %1418 = vmatpush1.bf16.msra.mxu0 0
        %1419 = vmatprep.subr.bf16.mxu0 0
        %1420 = vmatpush1.bf16.msra.mxu0 0
        %1421 = vmatprep.subr.bf16.mxu0 0
        %1422 = vmatpush1.bf16.msra.mxu0 0
        %1423 = vmatprep.mubr.bf16.mxu0 0
        %1424 = vmatmul.mubr.bf16.gmra.mrb[0].mxu0 %v1386
        %v1425 = vpop.f32.mrb[0].mxu0
        %v1426 = vadd.f32 0.0, %v1425
        %v1427 = vpop.f32.mrb[0].mxu0
        %v1428 = vpop.f32.mrb[0].mxu0
        %v1429 = vpop.f32.mrb[0].mxu0
        %1430 = vdwg.mxu0
        %v1431 = vadd.f32 %v1272, %v1426
        %1432 = vrot.lane.b32.xlu0 %v305, 44
        %v1433 = vpop.permute.xlu0 %1432
        %1434 = vrot.lane.b32.xlu0 %v305, 40
        %v1435 = vpop.permute.xlu0 %1434
        %v1437 = vsel %vm309, %v1433, 0
        %v1440 = vsel %vm309, %v1435, 0
        %1442 = vmatprep.subr.bf16.mxu0 0
        %1443 = vmatpush1.bf16.xpose.msra.mxu0 %v1440
        %1444 = vmatprep.subr.bf16.mxu0 0
        %1445 = vmatpush1.bf16.xpose.msra.mxu0 0
        %1446 = vmatprep.subr.bf16.mxu0 0
        %1447 = vmatpush1.bf16.xpose.msra.mxu0 0
        %1448 = vmatprep.subr.bf16.mxu0 0
        %1449 = vmatpush1.bf16.xpose.msra.mxu0 0
        %1450 = vmatprep.subr.bf16.mxu0 0
        %1451 = vmatpush1.bf16.xpose.msra.mxu0 0
        %1452 = vmatprep.subr.bf16.mxu0 0
        %1453 = vmatpush1.bf16.xpose.msra.mxu0 0
        %1454 = vmatprep.subr.bf16.mxu0 0
        %1455 = vmatpush1.bf16.xpose.msra.mxu0 0
        %1456 = vmatprep.subr.bf16.mxu0 0
        %1457 = vmatpush1.bf16.xpose.msra.mxu0 0
        %1458 = vmatprep.subr.bf16.mxu0 0
        %1459 = vmatpush1.bf16.xpose.msra.mxu0 0
        %1460 = vmatprep.subr.bf16.mxu0 0
        %1461 = vmatpush1.bf16.xpose.msra.mxu0 0
        %1462 = vmatprep.subr.bf16.mxu0 0
        %1463 = vmatpush1.bf16.xpose.msra.mxu0 0
        %1464 = vmatprep.subr.bf16.mxu0 0
        %1465 = vmatpush1.bf16.xpose.msra.mxu0 0
        %1466 = vmatprep.subr.bf16.mxu0 0
        %1467 = vmatpush1.bf16.xpose.msra.mxu0 0
        %1468 = vmatprep.subr.bf16.mxu0 0
        %1469 = vmatpush1.bf16.xpose.msra.mxu0 0
        %1470 = vmatprep.subr.bf16.mxu0 0
        %1471 = vmatpush1.bf16.xpose.msra.mxu0 0
        %1472 = vmatprep.subr.bf16.mxu0 0
        %1473 = vmatpush1.bf16.xpose.msra.mxu0 0
        %1474 = vmatprep.mubr.bf16.mxu0 0
        %1475 = vmatmul.mubr.bf16.gmra.mrb[0].mxu0 %v1437
        %v1476 = vpop.f32.mrb[0].mxu0
        %v1477 = vadd.f32 0.0, %v1476
        %v1478 = vpop.f32.mrb[0].mxu0
        %v1479 = vpop.f32.mrb[0].mxu0
        %v1480 = vpop.f32.mrb[0].mxu0
        %1481 = vdwg.mxu0
        %v1482 = vsel %vm356, %v1477, -inf
        %1483 = vmax.xlane.f32.xlu0 %v1482
        %v1484 = vpop.xlane.xlu0 %1483
        %v1485 = vsub.f32 %v1477, %v1484
        %v1486 = vmul.f32 %v1485, 1.442695
        %v1487 = vpow.pop %v1486
        %v1488 = vsel %vm356, %v1487, 0.0
        %1489 = vadd.xlane.f32.xlu0 %v1488
        %v1490 = vpop.xlane.xlu0 %1489
        %v1491 = vrcp.pop %v1490
        %v1492 = vmul.f32 %v1487, %v1491
        %v1493 = vpack.c.bf16 %v1492, %v1492
        %1494 = vrot.lane.b32.xlu0 %v305, 36
        %v1495 = vpop.permute.xlu0 %1494
        %v1497 = vsel %vm356, %v1493, 0
        %v1500 = vsel %vm374, %v1495, 0
        %1502 = vmatprep.subr.bf16.mxu0 0
        %1503 = vmatpush1.bf16.msra.mxu0 %v1500
        %1504 = vmatprep.subr.bf16.mxu0 0
        %1505 = vmatpush1.bf16.msra.mxu0 0
        %1506 = vmatprep.subr.bf16.mxu0 0
        %1507 = vmatpush1.bf16.msra.mxu0 0
        %1508 = vmatprep.subr.bf16.mxu0 0
        %1509 = vmatpush1.bf16.msra.mxu0 0
        %1510 = vmatprep.subr.bf16.mxu0 0
        %1511 = vmatpush1.bf16.msra.mxu0 0
        %1512 = vmatprep.subr.bf16.mxu0 0
        %1513 = vmatpush1.bf16.msra.mxu0 0
        %1514 = vmatprep.subr.bf16.mxu0 0
        %1515 = vmatpush1.bf16.msra.mxu0 0
        %1516 = vmatprep.subr.bf16.mxu0 0
        %1517 = vmatpush1.bf16.msra.mxu0 0
        %1518 = vmatprep.subr.bf16.mxu0 0
        %1519 = vmatpush1.bf16.msra.mxu0 0
        %1520 = vmatprep.subr.bf16.mxu0 0
        %1521 = vmatpush1.bf16.msra.mxu0 0
        %1522 = vmatprep.subr.bf16.mxu0 0
        %1523 = vmatpush1.bf16.msra.mxu0 0
        %1524 = vmatprep.subr.bf16.mxu0 0
        %1525 = vmatpush1.bf16.msra.mxu0 0
        %1526 = vmatprep.subr.bf16.mxu0 0
        %1527 = vmatpush1.bf16.msra.mxu0 0
        %1528 = vmatprep.subr.bf16.mxu0 0
        %1529 = vmatpush1.bf16.msra.mxu0 0
        %1530 = vmatprep.subr.bf16.mxu0 0
        %1531 = vmatpush1.bf16.msra.mxu0 0
        %1532 = vmatprep.subr.bf16.mxu0 0
        %1533 = vmatpush1.bf16.msra.mxu0 0
        %1534 = vmatprep.mubr.bf16.mxu0 0
        %1535 = vmatmul.mubr.bf16.gmra.mrb[0].mxu0 %v1497
        %v1536 = vpop.f32.mrb[0].mxu0
        %v1537 = vadd.f32 0.0, %v1536
        %v1538 = vpop.f32.mrb[0].mxu0
        %v1539 = vpop.f32.mrb[0].mxu0
        %v1540 = vpop.f32.mrb[0].mxu0
        %1541 = vdwg.mxu0
        %v1542 = vpack.c.bf16 %v1537, %v1537
        %v1543 = vld [vmem:[#allocation7 + $0xc] sm:$0xc]
        %v1545 = vunpack.c.l.b16 %v1543
        %v1546 = vpack.c.b16 %v1545, %v1545
        %v1547 = vrot.slane %v1546, 2
        %v1549 = vsel %vm309, %v1542, 0
        %v1552 = vsel %vm539, %v1547, 0
        %1554 = vmatprep.subr.bf16.mxu0 0
        %1555 = vmatpush1.bf16.msra.mxu0 %v1552
        %1556 = vmatprep.subr.bf16.mxu0 0
        %1557 = vmatpush1.bf16.msra.mxu0 0
        %1558 = vmatprep.subr.bf16.mxu0 0
        %1559 = vmatpush1.bf16.msra.mxu0 0
        %1560 = vmatprep.subr.bf16.mxu0 0
        %1561 = vmatpush1.bf16.msra.mxu0 0
        %1562 = vmatprep.subr.bf16.mxu0 0
        %1563 = vmatpush1.bf16.msra.mxu0 0
        %1564 = vmatprep.subr.bf16.mxu0 0
        %1565 = vmatpush1.bf16.msra.mxu0 0
        %1566 = vmatprep.subr.bf16.mxu0 0
        %1567 = vmatpush1.bf16.msra.mxu0 0
        %1568 = vmatprep.subr.bf16.mxu0 0
        %1569 = vmatpush1.bf16.msra.mxu0 0
        %1570 = vmatprep.subr.bf16.mxu0 0
        %1571 = vmatpush1.bf16.msra.mxu0 0
        %1572 = vmatprep.subr.bf16.mxu0 0
        %1573 = vmatpush1.bf16.msra.mxu0 0
        %1574 = vmatprep.subr.bf16.mxu0 0
        %1575 = vmatpush1.bf16.msra.mxu0 0
        %1576 = vmatprep.subr.bf16.mxu0 0
        %1577 = vmatpush1.bf16.msra.mxu0 0
        %1578 = vmatprep.subr.bf16.mxu0 0
        %1579 = vmatpush1.bf16.msra.mxu0 0
        %1580 = vmatprep.subr.bf16.mxu0 0
        %1581 = vmatpush1.bf16.msra.mxu0 0
        %1582 = vmatprep.subr.bf16.mxu0 0
        %1583 = vmatpush1.bf16.msra.mxu0 0
        %1584 = vmatprep.subr.bf16.mxu0 0
        %1585 = vmatpush1.bf16.msra.mxu0 0
        %1586 = vmatprep.mubr.bf16.mxu0 0
        %1587 = vmatmul.mubr.bf16.gmra.mrb[0].mxu0 %v1549
        %v1588 = vpop.f32.mrb[0].mxu0
        %v1589 = vadd.f32 0.0, %v1588
        %v1590 = vpop.f32.mrb[0].mxu0
        %v1591 = vpop.f32.mrb[0].mxu0
        %v1592 = vpop.f32.mrb[0].mxu0
        %1593 = vdwg.mxu0
        %v1594 = vadd.f32 %v1431, %v1589
        %v1595 = vld [vmem:[%s3] sm:$0x1]
        %v1597 = vlaneseq
        %v1598 = vshrl.u32 %v1597, 7
        %v1599 = vsub.s32 0, %v1598
        %v1600 = vrot.slane %v1595, %v1599
        %v1602 = vadd.f32 %v1594, %v1600
        %1603 = vst.msk [vmem:[%s241] sm:$0xff] %vm261, %v1602
        %s1604 = sand.u32 %s119, 1
        %s1605 = scalar_lea.sflag [#allocation4], %s1604
        %s1606 = sand.u32 %s119, 1
        %s1607 = smul.addr %s1606, 8
        %s1608 = scalar_lea.vmem [#allocation8], %s1607
        // Predicated region
        $region49: #{tpu_custom_call.1} parent=35 // pred_check
          %p1609 = pneg %p129
        $region50: #{tpu_custom_call.1} parent=35 // pred_check_branch
          %1611 = sbr.rel (%p1609) target = $region52
        $region51: #{tpu_custom_call.1} parent=35 // pred_region
          %s1613 = ssub.s32 128, 128
          %1614 = vsyncadd %s1605, %s1613
          %s1615 = smul.addr %s22, 128
          %s1616 = scalar_lea.hbm %s4, %s1615
          %s1618 = sshll.u32 %s1608, 4
          %s1619 = int_to_ptr.vmem [resolvable:$true] %s1618
          %1621 = dma.vmem_to_hbm [thread:$0]  %s1619, 128, %s1616, %s1605
        $region52: #{tpu_custom_call.1} parent=35 // pred_fallthru
          _
      $region36: #{tpu_custom_call.1} parent=5 // pred_fallthru
        _
      %p1622 = scmp.le.s32.totalorder 2, %s17
      // Predicated region
      $region53: #{tpu_custom_call.1} parent=5 // pred_check
        %p1623 = pneg %p1622
      $region54: #{tpu_custom_call.1} parent=5 // pred_check_branch
        %1625 = sbr.rel (%p1623) target = $region56
      $region55: #{tpu_custom_call.1} parent=5 // pred_region
        %s1626 = ssub.s32 %s17, 2
        // Predicated region
        $region57: #{tpu_custom_call.1} parent=55 // pred_check
          %p1627 = pneg %p135
        $region58: #{tpu_custom_call.1} parent=55 // pred_check_branch
          %1629 = sbr.rel (%p1627) target = $region60
        $region59: #{tpu_custom_call.1} parent=55 // pred_region
          %s1630 = sand.u32 %s120, 1
          %s1631 = scalar_lea.sflag [#allocation4], %s1630
          %s1632 = sand.u32 %s120, 1
          %s1633 = smul.addr %s1632, 8
          %s1634 = scalar_lea.vmem [#allocation8], %s1633
          %1635 = dma.done %s1631, 128
        $region60: #{tpu_custom_call.1} parent=55 // pred_fallthru
          _
      $region56: #{tpu_custom_call.1} parent=5 // pred_fallthru
        _
    $region6: #{tpu_custom_call.1} parent=1 // loop_footer
      %s21 = sadd.s32 1, %s17
    $region7: #{tpu_custom_call.1} parent=1 // loop_footer_branch
      %16 = sbr.rel target = $region3
    $region8: #{tpu_custom_call.1} parent=1 // loop_exit
      _
    %1636 = vsyncpa [#allocation3], 1
    %s1637 = scalar_lea.sflag [#allocation3], 1
    %1638 = vsyncpa %s1637, 1
    %1639 = vsyncpa [#allocation6], 1
    %1640 = vsyncpa [#allocation4], 1
    %s1641 = scalar_lea.sflag [#allocation4], 1
    %1642 = vsyncpa %s1641, 1

</llo_original>
